<compile_context>
chip_gen: v6e
topology: v6e:2x2x1
jax: 0.10.0
libtpu: 0.0.40
codegen_flags: <defaults>
</compile_context>

<pallas_src>
import functools

import numpy as np
import jax
import jax.numpy as jnp
from jax import lax
from jax.experimental import pallas as pl
from jax.experimental.pallas import tpu as pltpu


# ----------------------------------------------------------------------------
# Fused SPAB2 Pallas kernel
# ----------------------------------------------------------------------------

def _sigmoid(v):
    # exp and the approximate reciprocal both run on the EUP slot (otherwise
    # idle), keeping the activations off the VPU divide path.
    return pl.reciprocal(1.0 + jnp.exp(-v), approx=True)


def _spab2_kernel(x_ref, mask_ref,
                  w1_ref, b1_ref, w2_ref, b2_ref, w3_ref, b3_ref,
                  a1_ref, a2_ref,
                  out3_ref, out1_ref, slab_ref,
                  *, width, c_in, c_mid, c_out):
    """Fused SPAB2 forward for one lane-block (block_batch images).

    x_ref    : VMEM (1, Cin, LW)            input, spatial (x batch) on lanes
    mask_ref : VMEM (9, LW)                 0/1 boundary mask per 3x3 tap
    w1_ref   : VMEM (2*Cmid, 9*Cin)         stage-1 weights, branches stacked
    w2_ref   : VMEM (2*Cmid, 9*2*Cmid)      stage-2 weights, branch block-diag
    w3_ref   : VMEM (2*Cout, 9*2*Cmid)      stage-3 weights, branch block-diag
    b*_ref   : VMEM (2*C, 1)                biases (main ++ extra)
    a1/2_ref : VMEM (2*Cmid, 1)             CustomActivation alphas (duplicated)
    out3_ref : VMEM (1, Cout, LW)           silu(out3 + extra_out3) + x
    out1_ref : VMEM (1, Cmid, LW)           out1 (first conv, main branch)
    slab_ref : VMEM (9*max(Cin,2Cmid), LW)  im2col scratch, reused per stage
    """
    lw = x_ref.shape[-1]

    def im2col(v, c):
        # v: (c, LW) f32 -> slab rows [0, 9*c): tap-major, rolled + masked.
        # Boundary masks zero out-of-image taps, so lane rolls across image
        # boundaries (when batch is folded onto lanes) are harmless.
        k = 0
        for dy in (-1, 0, 1):
            for dx in (-1, 0, 1):
                s = dy * width + dx
                vr = v if s == 0 else pltpu.roll(v, (-s) % lw, 1)
                slab_ref[k * c:(k + 1) * c, :] = vr * mask_ref[k:k + 1, :]
                k += 1
        return slab_ref[0:9 * c, :]

    x = x_ref[0].astype(jnp.float32)                       # (Cin, LW)

    # Stage 1: both branches read x -> single stacked matmul.
    s = im2col(x, c_in)
    o1 = jnp.dot(w1_ref[...], s, preferred_element_type=jnp.float32) + b1_ref[...]
    a1 = o1 * _sigmoid(a1_ref[...] * o1)                   # CustomActivation 1

    # Stage 2: branch block-diagonal weight -> one matmul for both branches.
    s = im2col(a1, 2 * c_mid)
    o2 = jnp.dot(w2_ref[...], s, preferred_element_type=jnp.float32) + b2_ref[...]
    a2 = o2 * _sigmoid(a2_ref[...] * o2)                   # CustomActivation 2

    # Stage 3.
    s = im2col(a2, 2 * c_mid)
    o3 = jnp.dot(w3_ref[...], s, preferred_element_type=jnp.float32) + b3_ref[...]

    comb = o3[0:c_out, :] + o3[c_out:2 * c_out, :]         # main + extra branch
    y = comb * _sigmoid(comb) + x                          # SiLU + residual
    out3_ref[0] = y.astype(out3_ref.dtype)
    out1_ref[0] = o1[0:c_mid, :].astype(out1_ref.dtype)


def _build_tap_masks(h, w):
    """(9, H*W) 0/1 masks: tap (dy,dx) is valid where (h+dy, w+dx) is in-image."""
    m = np.zeros((9, h * w), np.float32)
    hh, ww = np.meshgrid(np.arange(h), np.arange(w), indexing="ij")
    k = 0
    for dy in (-1, 0, 1):
        for dx in (-1, 0, 1):
            valid = ((hh + dy >= 0) & (hh + dy < h) &
                     (ww + dx >= 0) & (ww + dx < w))
            m[k] = valid.reshape(-1).astype(np.float32)
            k += 1
    return jnp.asarray(m)


def spab2_forward_pallas(x, w1s, b1s, w2s, b2s, w3s, b3s, a1s, a2s,
                         *, block_batch=None):
    """x: (N, C, H, W). Weight slabs packed by pack_spab2_params()."""
    n, c_in, h, w = x.shape
    hw = h * w
    c_mid = w1s.shape[0] // 2
    c_out = w3s.shape[0] // 2

    if block_batch is None:
        # Fold batch onto lanes, but keep >= 2 grid steps (v7x has 2 TCs).
        block_batch = max(1, n // 2)
    if n % block_batch != 0:
        block_batch = 1
    nb = n // block_batch
    lw = block_batch * hw

    # Lane-dense layout: lane index = image_in_block * HW + pixel.
    xr = (x.reshape(nb, block_batch, c_in, hw)
           .transpose(0, 2, 1, 3).reshape(nb, c_in, lw))
    masks = jnp.tile(_build_tap_masks(h, w), (1, block_batch))         # (9, lw)

    kernel = functools.partial(_spab2_kernel, width=w,
                               c_in=c_in, c_mid=c_mid, c_out=c_out)

    def const_spec(shape):
        return pl.BlockSpec(shape, lambda i: (0,) * len(shape))

    out3, out1 = pl.pallas_call(
        kernel,
        out_shape=(jax.ShapeDtypeStruct((nb, c_out, lw), x.dtype),
                   jax.ShapeDtypeStruct((nb, c_mid, lw), x.dtype)),
        grid_spec=pltpu.PrefetchScalarGridSpec(
            num_scalar_prefetch=0,
            grid=(nb,),
            in_specs=[
                pl.BlockSpec((1, c_in, lw), lambda i: (i, 0, 0)),      # x block
                const_spec(masks.shape),                               # masks
                const_spec(w1s.shape), const_spec(b1s.shape),
                const_spec(w2s.shape), const_spec(b2s.shape),
                const_spec(w3s.shape), const_spec(b3s.shape),
                const_spec(a1s.shape), const_spec(a2s.shape),
            ],
            out_specs=(
                pl.BlockSpec((1, c_out, lw), lambda i: (i, 0, 0)),
                pl.BlockSpec((1, c_mid, lw), lambda i: (i, 0, 0)),
            ),
            scratch_shapes=[
                pltpu.VMEM((9 * max(c_in, 2 * c_mid), lw), jnp.float32),
            ]),
        compiler_params=pltpu.CompilerParams(
            dimension_semantics=("parallel",)),
    )(xr, masks, w1s, b1s, w2s, b2s, w3s, b3s, a1s, a2s)

    def unfold(o, c):
        return (o.reshape(nb, c, block_batch, hw)
                 .transpose(0, 2, 1, 3).reshape(n, c, h, w))

    out3 = unfold(out3, c_out)
    out1 = unfold(out1, c_mid)
    return out3, out1, out3                    # matches module's (out3, out1, out3)


# ----------------------------------------------------------------------------
# Conv3XC2 parameter construction / reparameterization (trace-time glue)
# ----------------------------------------------------------------------------

def init_conv3xc2_params(key, c_in, c_out, gain, groups,
                         w_scale=0.25, b_scale=0.1):
    ks = jax.random.split(key, 8)

    def rnd(k, shape, s):
        return s * jax.random.normal(k, shape, jnp.float32)

    return dict(
        w1=rnd(ks[0], (c_in * gain, c_in // groups, 1, 1), w_scale),
        b1=rnd(ks[1], (c_in * gain,), b_scale),
        w2=rnd(ks[2], (c_out * gain, c_in * gain // groups, 3, 3), w_scale),
        b2=rnd(ks[3], (c_out * gain,), b_scale),
        w3=rnd(ks[4], (c_out, c_out * gain // groups, 1, 1), w_scale),
        b3=rnd(ks[5], (c_out,), b_scale),
        skw=rnd(ks[6], (c_out, c_in // groups, 1, 1), w_scale),
        skb=rnd(ks[7], (c_out,), b_scale),
    )


def collapse_conv3xc2(p, c_in, c_out, gain, groups):
    """Replicates Conv3XC2.update_params(): fold 1x1->3x3->1x1 + 1x1 skip into
    one grouped 3x3 conv. Returns (weight (c_out, c_in//groups, 3, 3), bias)."""
    hp = lax.Precision.HIGHEST
    ig = c_in // groups
    og = c_out // groups
    m_blk = (c_in * gain) // groups
    o_blk = (c_out * gain) // groups
    weight = jnp.zeros((c_out, ig, 3, 3), jnp.float32)
    bias = jnp.zeros((c_out,), jnp.float32)
    for g in range(groups):
        w1_g = p["w1"][g * m_blk:(g + 1) * m_blk, :, 0, 0]       # (m_blk, ig)
        b1_g = p["b1"][g * m_blk:(g + 1) * m_blk]
        w2_g = p["w2"][g * o_blk:(g + 1) * o_blk]                # (o_blk, m_blk, 3, 3)
        b2_g = p["b2"][g * o_blk:(g + 1) * o_blk]
        w3_g = p["w3"][g * og:(g + 1) * og, :, 0, 0]             # (og, o_blk)
        b3_g = p["b3"][g * og:(g + 1) * og]
        w12 = jnp.einsum("omyx,mi->oiyx", w2_g, w1_g, precision=hp)
        w_g = jnp.einsum("po,oiyx->piyx", w3_g, w12, precision=hp)
        b_mid = jnp.einsum("omyx,m->o", w2_g, b1_g, precision=hp) + b2_g
        b_g = jnp.einsum("po,o->p", w3_g, b_mid, precision=hp) + b3_g
        weight = weight.at[g * og:(g + 1) * og].set(w_g)
        bias = bias.at[g * og:(g + 1) * og].set(b_g)
    weight = weight.at[:, :, 1, 1].add(p["skw"][:, :, 0, 0])     # padded 1x1 skip
    bias = bias + p["skb"]
    return weight, bias


def grouped_weight_to_taps(w_grouped, groups):
    """(c_out, c_in//groups, 3, 3) grouped -> (9, c_out, c_in) dense block-diag
    per-tap matrices (tap k = ky*3 + kx, matching the kernel's im2col order)."""
    c_out, cig, kh, kw = w_grouped.shape
    c_in = cig * groups
    og = c_out // groups
    dense = jnp.zeros((c_out, c_in, kh, kw), jnp.float32)
    for g in range(groups):
        dense = dense.at[g * og:(g + 1) * og,
                         g * cig:(g + 1) * cig].set(w_grouped[g * og:(g + 1) * og])
    return dense.transpose(2, 3, 0, 1).reshape(kh * kw, c_out, c_in)


def pack_stage_shared(taps_main, taps_extra):
    """Both branches read the same im2col slab (stage 1): stack output rows.
    taps_*: (9, Co, Ci) -> (2*Co, 9*Ci), column index = tap*Ci + channel."""
    w = jnp.concatenate([taps_main, taps_extra], axis=1)     # (9, 2Co, Ci)
    k, co2, ci = w.shape
    return w.transpose(1, 0, 2).reshape(co2, k * ci)


def pack_stage_blockdiag(taps_main, taps_extra):
    """Each branch reads its own half of a 2*Ci-channel slab (stages 2/3).
    taps_*: (9, Co, Ci) -> (2*Co, 9*2*Ci), column index = tap*2Ci + channel."""
    k, co, ci = taps_main.shape
    w = jnp.zeros((k, 2 * co, 2 * ci), taps_main.dtype)
    w = w.at[:, :co, :ci].set(taps_main)
    w = w.at[:, co:, ci:].set(taps_extra)
    return w.transpose(1, 0, 2).reshape(2 * co, k * 2 * ci)


def pack_spab2_params(conv_params, alpha1, alpha2, c_in, c_mid, c_out, gain, groups):
    """conv_params = [c1, c2, c3, extra_c1, extra_c2, extra_c3] param dicts."""
    dims = [(c_in, c_mid), (c_mid, c_mid), (c_mid, c_out)] * 2
    collapsed = [collapse_conv3xc2(p, ci, co, gain, groups)
                 for p, (ci, co) in zip(conv_params, dims)]
    taps = [grouped_weight_to_taps(wb[0], groups) for wb in collapsed]
    biases = [wb[1] for wb in collapsed]
    w1s = pack_stage_shared(taps[0], taps[3])
    w2s = pack_stage_blockdiag(taps[1], taps[4])
    w3s = pack_stage_blockdiag(taps[2], taps[5])
    b1s = jnp.concatenate([biases[0], biases[3]])[:, None]
    b2s = jnp.concatenate([biases[1], biases[4]])[:, None]
    b3s = jnp.concatenate([biases[2], biases[5]])[:, None]
    a1s = jnp.concatenate([alpha1, alpha1])[:, None]
    a2s = jnp.concatenate([alpha2, alpha2])[:, None]
    return w1s, b1s, w2s, b2s, w3s, b3s, a1s, a2s


# ----------------------------------------------------------------------------
# Pure-JAX reference (un-collapsed Conv3XC2 path) for verification
# ----------------------------------------------------------------------------

def _conv_nchw(x, w, b, groups, padding):
    y = lax.conv_general_dilated(
        x, w, window_strides=(1, 1),
        padding=((padding, padding), (padding, padding)),
        dimension_numbers=("NCHW", "OIHW", "NCHW"),
        feature_group_count=groups,
        precision=lax.Precision.HIGHEST)
    return y + b.reshape(1, -1, 1, 1)


def conv3xc2_ref(x, p, groups):
    """Training-path math (conv stack on padded x + skip) == eval_conv(x)."""
    xp = jnp.pad(x, ((0, 0), (0, 0), (1, 1), (1, 1)))
    y = _conv_nchw(xp, p["w1"], p["b1"], groups, 0)
    y = _conv_nchw(y, p["w2"], p["b2"], groups, 0)
    y = _conv_nchw(y, p["w3"], p["b3"], groups, 0)
    return y + _conv_nchw(x, p["skw"], p["skb"], groups, 0)


def spab2_ref(x, conv_params, alpha1, alpha2, groups=2):
    def act(v, a):
        return v * (1.0 / (1.0 + jnp.exp(-(a.reshape(1, -1, 1, 1) * v))))

    p1, p2, p3, e1, e2, e3 = conv_params
    o1 = conv3xc2_ref(x, p1, groups)
    o2 = conv3xc2_ref(act(o1, alpha1), p2, groups)
    o3 = conv3xc2_ref(act(o2, alpha2), p3, groups)
    q1 = conv3xc2_ref(x, e1, groups)
    q2 = conv3xc2_ref(act(q1, alpha1), e2, groups)
    q3 = conv3xc2_ref(act(q2, alpha2), e3, groups)
    comb = o3 + q3
    y = comb * (1.0 / (1.0 + jnp.exp(-comb))) + x
    return y, o1, y


# ----------------------------------------------------------------------------
# Demo / self-check
# ----------------------------------------------------------------------------

if __name__ == "__main__":
    N, C, H, W = 2, 8, 16, 16          # in = mid = out channels, groups = 2
    GAIN, GROUPS = 2, 2

    key = jax.random.PRNGKey(0)
    keys = jax.random.split(key, 9)
    x = jax.random.normal(keys[0], (N, C, H, W), jnp.float32)

    # Six Conv3XC2 modules: c1_r, c2_r, c3_r, extra_c1_r, extra_c2_r, extra_c3_r
    conv_params = [init_conv3xc2_params(keys[1 + i], C, C, GAIN, GROUPS)
                   for i in range(6)]
    alpha1 = 1.0 + 0.1 * jax.random.normal(keys[7], (C,), jnp.float32)
    alpha2 = 1.0 + 0.1 * jax.random.normal(keys[8], (C,), jnp.float32)

    # Trace-time reparameterization + K-stacked / branch-fused weight packing.
    packed = pack_spab2_params(conv_params, alpha1, alpha2, C, C, C, GAIN, GROUPS)

    fwd = jax.jit(spab2_forward_pallas)
    out3, out1, _ = fwd(x, *packed)
    out3, out1 = jax.block_until_ready((out3, out1))

    ref3, ref1, _ = spab2_ref(x, conv_params, alpha1, alpha2, GROUPS)
    ref3, ref1 = jax.block_until_ready((ref3, ref1))

    # Tolerance relaxed vs. the previous HIGHEST-precision version: the kernel
    # now uses the native single-pass bf16 MXU path (f32 accumulation) and EUP
    # approximate reciprocals for the sigmoids (per the performance review).
    np.testing.assert_allclose(np.asarray(out3), np.asarray(ref3),
                               rtol=5e-2, atol=5e-2)
    np.testing.assert_allclose(np.asarray(out1), np.asarray(ref1),
                               rtol=5e-2, atol=5e-2)
    print("KERNEL_OK")
</pallas_src>

<mosaic_0001>
module attributes {stable_mosaic.version = 11 : i64} {
  func.func @_spab2_kernel(%arg0: i32, %arg1: memref<1x8x256xf32, #tpu.memory_space<vmem>>, %arg2: memref<9x256xf32, #tpu.memory_space<vmem>>, %arg3: memref<16x72xf32, #tpu.memory_space<vmem>>, %arg4: memref<16x1xf32, #tpu.memory_space<vmem>>, %arg5: memref<16x144xf32, #tpu.memory_space<vmem>>, %arg6: memref<16x1xf32, #tpu.memory_space<vmem>>, %arg7: memref<16x144xf32, #tpu.memory_space<vmem>>, %arg8: memref<16x1xf32, #tpu.memory_space<vmem>>, %arg9: memref<16x1xf32, #tpu.memory_space<vmem>>, %arg10: memref<16x1xf32, #tpu.memory_space<vmem>>, %arg11: memref<1x8x256xf32, #tpu.memory_space<vmem>>, %arg12: memref<1x8x256xf32, #tpu.memory_space<vmem>>, %arg13: memref<144x256xf32, #tpu.memory_space<vmem>>) attributes {dimension_semantics = [#tpu.dimension_semantics<parallel>], iteration_bounds = array<i64: 2>, scalar_prefetch = 0 : i64, scratch_operands = 1 : i64, tpu.core_type = #tpu.core_type<tc>, window_params = [{transform_indices = @transform_0, window_bounds = array<i64: 1, 8, 256>}, {pipeline_mode = #tpu.pipeline_mode<synchronous>, transform_indices = @transform_1, window_bounds = array<i64: 9, 256>}, {pipeline_mode = #tpu.pipeline_mode<synchronous>, transform_indices = @transform_2, window_bounds = array<i64: 16, 72>}, {pipeline_mode = #tpu.pipeline_mode<synchronous>, transform_indices = @transform_3, window_bounds = array<i64: 16, 1>}, {pipeline_mode = #tpu.pipeline_mode<synchronous>, transform_indices = @transform_4, window_bounds = array<i64: 16, 144>}, {pipeline_mode = #tpu.pipeline_mode<synchronous>, transform_indices = @transform_5, window_bounds = array<i64: 16, 1>}, {pipeline_mode = #tpu.pipeline_mode<synchronous>, transform_indices = @transform_6, window_bounds = array<i64: 16, 144>}, {pipeline_mode = #tpu.pipeline_mode<synchronous>, transform_indices = @transform_7, window_bounds = array<i64: 16, 1>}, {pipeline_mode = #tpu.pipeline_mode<synchronous>, transform_indices = @transform_8, window_bounds = array<i64: 16, 1>}, {pipeline_mode = #tpu.pipeline_mode<synchronous>, transform_indices = @transform_9, window_bounds = array<i64: 16, 1>}, {transform_indices = @transform_10, window_bounds = array<i64: 1, 8, 256>}, {transform_indices = @transform_11, window_bounds = array<i64: 1, 8, 256>}]} {
    %c0 = arith.constant 0 : index
    %c0_0 = arith.constant 0 : index
    %c0_1 = arith.constant 0 : index
    %0 = vector.load %arg1[%c0, %c0_0, %c0_1] : memref<1x8x256xf32, #tpu.memory_space<vmem>>, vector<1x8x256xf32>
    %1 = vector.shape_cast %0 : vector<1x8x256xf32> to vector<8x256xf32>
    %c17_i32 = arith.constant 17 : i32
    %2 = tpu.dynamic_rotate %1 by %c17_i32 dim 1 : vector<8x256xf32>, i32 -> vector<8x256xf32>
    %c0_2 = arith.constant 0 : index
    %c0_3 = arith.constant 0 : index
    %3 = vector.load %arg2[%c0_2, %c0_3] : memref<9x256xf32, #tpu.memory_space<vmem>>, vector<1x256xf32>
    %4 = vector.broadcast %3 : vector<1x256xf32> to vector<8x256xf32>
    %5 = arith.mulf %2, %4 : vector<8x256xf32>
    %c0_4 = arith.constant 0 : index
    %c0_5 = arith.constant 0 : index
    %6 = vector.load %arg13[%c0_4, %c0_5] : memref<144x256xf32, #tpu.memory_space<vmem>>, vector<8x256xf32>
    tpu.vector_store %arg13[%c0_4, %c0_5], %5 {strides = array<i32>} : memref<144x256xf32, #tpu.memory_space<vmem>>, vector<8x256xf32>,
    %c16_i32 = arith.constant 16 : i32
    %7 = tpu.dynamic_rotate %1 by %c16_i32 dim 1 : vector<8x256xf32>, i32 -> vector<8x256xf32>
    %c1 = arith.constant 1 : index
    %c0_6 = arith.constant 0 : index
    %8 = vector.load %arg2[%c1, %c0_6] : memref<9x256xf32, #tpu.memory_space<vmem>>, vector<1x256xf32>
    %9 = vector.broadcast %8 : vector<1x256xf32> to vector<8x256xf32>
    %10 = arith.mulf %7, %9 : vector<8x256xf32>
    %c8 = arith.constant 8 : index
    %c0_7 = arith.constant 0 : index
    %11 = vector.load %arg13[%c8, %c0_7] : memref<144x256xf32, #tpu.memory_space<vmem>>, vector<8x256xf32>
    tpu.vector_store %arg13[%c8, %c0_7], %10 {strides = array<i32>} : memref<144x256xf32, #tpu.memory_space<vmem>>, vector<8x256xf32>,
    %c15_i32 = arith.constant 15 : i32
    %12 = tpu.dynamic_rotate %1 by %c15_i32 dim 1 : vector<8x256xf32>, i32 -> vector<8x256xf32>
    %c2 = arith.constant 2 : index
    %c0_8 = arith.constant 0 : index
    %13 = vector.load %arg2[%c2, %c0_8] : memref<9x256xf32, #tpu.memory_space<vmem>>, vector<1x256xf32>
    %14 = vector.broadcast %13 : vector<1x256xf32> to vector<8x256xf32>
    %15 = arith.mulf %12, %14 : vector<8x256xf32>
    %c16 = arith.constant 16 : index
    %c0_9 = arith.constant 0 : index
    %16 = vector.load %arg13[%c16, %c0_9] : memref<144x256xf32, #tpu.memory_space<vmem>>, vector<8x256xf32>
    tpu.vector_store %arg13[%c16, %c0_9], %15 {strides = array<i32>} : memref<144x256xf32, #tpu.memory_space<vmem>>, vector<8x256xf32>,
    %c1_i32 = arith.constant 1 : i32
    %17 = tpu.dynamic_rotate %1 by %c1_i32 dim 1 : vector<8x256xf32>, i32 -> vector<8x256xf32>
    %c3 = arith.constant 3 : index
    %c0_10 = arith.constant 0 : index
    %18 = vector.load %arg2[%c3, %c0_10] : memref<9x256xf32, #tpu.memory_space<vmem>>, vector<1x256xf32>
    %19 = vector.broadcast %18 : vector<1x256xf32> to vector<8x256xf32>
    %20 = arith.mulf %17, %19 : vector<8x256xf32>
    %c24 = arith.constant 24 : index
    %c0_11 = arith.constant 0 : index
    %21 = vector.load %arg13[%c24, %c0_11] : memref<144x256xf32, #tpu.memory_space<vmem>>, vector<8x256xf32>
    tpu.vector_store %arg13[%c24, %c0_11], %20 {strides = array<i32>} : memref<144x256xf32, #tpu.memory_space<vmem>>, vector<8x256xf32>,
    %c4 = arith.constant 4 : index
    %c0_12 = arith.constant 0 : index
    %22 = vector.load %arg2[%c4, %c0_12] : memref<9x256xf32, #tpu.memory_space<vmem>>, vector<1x256xf32>
    %23 = vector.broadcast %22 : vector<1x256xf32> to vector<8x256xf32>
    %24 = arith.mulf %1, %23 : vector<8x256xf32>
    %c32 = arith.constant 32 : index
    %c0_13 = arith.constant 0 : index
    %25 = vector.load %arg13[%c32, %c0_13] : memref<144x256xf32, #tpu.memory_space<vmem>>, vector<8x256xf32>
    tpu.vector_store %arg13[%c32, %c0_13], %24 {strides = array<i32>} : memref<144x256xf32, #tpu.memory_space<vmem>>, vector<8x256xf32>,
    %c255_i32 = arith.constant 255 : i32
    %26 = tpu.dynamic_rotate %1 by %c255_i32 dim 1 : vector<8x256xf32>, i32 -> vector<8x256xf32>
    %c5 = arith.constant 5 : index
    %c0_14 = arith.constant 0 : index
    %27 = vector.load %arg2[%c5, %c0_14] : memref<9x256xf32, #tpu.memory_space<vmem>>, vector<1x256xf32>
    %28 = vector.broadcast %27 : vector<1x256xf32> to vector<8x256xf32>
    %29 = arith.mulf %26, %28 : vector<8x256xf32>
    %c40 = arith.constant 40 : index
    %c0_15 = arith.constant 0 : index
    %30 = vector.load %arg13[%c40, %c0_15] : memref<144x256xf32, #tpu.memory_space<vmem>>, vector<8x256xf32>
    tpu.vector_store %arg13[%c40, %c0_15], %29 {strides = array<i32>} : memref<144x256xf32, #tpu.memory_space<vmem>>, vector<8x256xf32>,
    %c241_i32 = arith.constant 241 : i32
    %31 = tpu.dynamic_rotate %1 by %c241_i32 dim 1 : vector<8x256xf32>, i32 -> vector<8x256xf32>
    %c6 = arith.constant 6 : index
    %c0_16 = arith.constant 0 : index
    %32 = vector.load %arg2[%c6, %c0_16] : memref<9x256xf32, #tpu.memory_space<vmem>>, vector<1x256xf32>
    %33 = vector.broadcast %32 : vector<1x256xf32> to vector<8x256xf32>
    %34 = arith.mulf %31, %33 : vector<8x256xf32>
    %c48 = arith.constant 48 : index
    %c0_17 = arith.constant 0 : index
    %35 = vector.load %arg13[%c48, %c0_17] : memref<144x256xf32, #tpu.memory_space<vmem>>, vector<8x256xf32>
    tpu.vector_store %arg13[%c48, %c0_17], %34 {strides = array<i32>} : memref<144x256xf32, #tpu.memory_space<vmem>>, vector<8x256xf32>,
    %c240_i32 = arith.constant 240 : i32
    %36 = tpu.dynamic_rotate %1 by %c240_i32 dim 1 : vector<8x256xf32>, i32 -> vector<8x256xf32>
    %c7 = arith.constant 7 : index
    %c0_18 = arith.constant 0 : index
    %37 = vector.load %arg2[%c7, %c0_18] : memref<9x256xf32, #tpu.memory_space<vmem>>, vector<1x256xf32>
    %38 = vector.broadcast %37 : vector<1x256xf32> to vector<8x256xf32>
    %39 = arith.mulf %36, %38 : vector<8x256xf32>
    %c56 = arith.constant 56 : index
    %c0_19 = arith.constant 0 : index
    %40 = vector.load %arg13[%c56, %c0_19] : memref<144x256xf32, #tpu.memory_space<vmem>>, vector<8x256xf32>
    tpu.vector_store %arg13[%c56, %c0_19], %39 {strides = array<i32>} : memref<144x256xf32, #tpu.memory_space<vmem>>, vector<8x256xf32>,
    %c239_i32 = arith.constant 239 : i32
    %41 = tpu.dynamic_rotate %1 by %c239_i32 dim 1 : vector<8x256xf32>, i32 -> vector<8x256xf32>
    %c8_20 = arith.constant 8 : index
    %c0_21 = arith.constant 0 : index
    %42 = vector.load %arg2[%c8_20, %c0_21] : memref<9x256xf32, #tpu.memory_space<vmem>>, vector<1x256xf32>
    %43 = vector.broadcast %42 : vector<1x256xf32> to vector<8x256xf32>
    %44 = arith.mulf %41, %43 : vector<8x256xf32>
    %c64 = arith.constant 64 : index
    %c0_22 = arith.constant 0 : index
    %45 = vector.load %arg13[%c64, %c0_22] : memref<144x256xf32, #tpu.memory_space<vmem>>, vector<8x256xf32>
    tpu.vector_store %arg13[%c64, %c0_22], %44 {strides = array<i32>} : memref<144x256xf32, #tpu.memory_space<vmem>>, vector<8x256xf32>,
    %c0_23 = arith.constant 0 : index
    %c0_24 = arith.constant 0 : index
    %46 = vector.load %arg13[%c0_23, %c0_24] : memref<144x256xf32, #tpu.memory_space<vmem>>, vector<72x256xf32>
    %c0_25 = arith.constant 0 : index
    %c0_26 = arith.constant 0 : index
    %47 = vector.load %arg3[%c0_25, %c0_26] : memref<16x72xf32, #tpu.memory_space<vmem>>, vector<16x72xf32>
    %cst = arith.constant dense<0.000000e+00> : vector<16x256xf32>
    %48 = tpu.matmul %47, %46, %cst {dimension_numbers = #tpu.dot_dimension_numbers<[1], [0], [0], [1], [0, 0, 1, 1], [], []>} : vector<16x72xf32>, vector<72x256xf32>, vector<16x256xf32> -> vector<16x256xf32>
    %c0_27 = arith.constant 0 : index
    %c0_28 = arith.constant 0 : index
    %49 = vector.load %arg4[%c0_27, %c0_28] : memref<16x1xf32, #tpu.memory_space<vmem>>, vector<16x1xf32>
    %50 = vector.broadcast %49 : vector<16x1xf32> to vector<16x256xf32>
    %51 = arith.addf %48, %50 : vector<16x256xf32>
    %c0_29 = arith.constant 0 : index
    %c0_30 = arith.constant 0 : index
    %52 = vector.load %arg9[%c0_29, %c0_30] : memref<16x1xf32, #tpu.memory_space<vmem>>, vector<16x1xf32>
    %53 = vector.broadcast %52 : vector<16x1xf32> to vector<16x256xf32>
    %54 = arith.mulf %53, %51 : vector<16x256xf32>
    %cst_31 = arith.constant 0.000000e+00 : f32
    %55 = vector.broadcast %cst_31 : f32 to vector<16x256xf32>
    %56 = arith.subf %55, %54 : vector<16x256xf32>
    %57 = math.exp %56 : vector<16x256xf32>
    %cst_32 = arith.constant 1.000000e+00 : f32
    %58 = vector.broadcast %cst_32 : f32 to vector<16x256xf32>
    %59 = arith.addf %58, %57 : vector<16x256xf32>
    %60 = tpu.reciprocal %59 {approx = true} : vector<16x256xf32> -> vector<16x256xf32>
    %61 = arith.mulf %51, %60 : vector<16x256xf32>
    %c17_i32_33 = arith.constant 17 : i32
    %62 = tpu.dynamic_rotate %61 by %c17_i32_33 dim 1 : vector<16x256xf32>, i32 -> vector<16x256xf32>
    %c0_34 = arith.constant 0 : index
    %c0_35 = arith.constant 0 : index
    %63 = vector.load %arg2[%c0_34, %c0_35] : memref<9x256xf32, #tpu.memory_space<vmem>>, vector<1x256xf32>
    %64 = vector.broadcast %63 : vector<1x256xf32> to vector<16x256xf32>
    %65 = arith.mulf %62, %64 : vector<16x256xf32>
    %c0_36 = arith.constant 0 : index
    %c0_37 = arith.constant 0 : index
    %66 = vector.load %arg13[%c0_36, %c0_37] : memref<144x256xf32, #tpu.memory_space<vmem>>, vector<16x256xf32>
    tpu.vector_store %arg13[%c0_36, %c0_37], %65 {strides = array<i32>} : memref<144x256xf32, #tpu.memory_space<vmem>>, vector<16x256xf32>,
    %c16_i32_38 = arith.constant 16 : i32
    %67 = tpu.dynamic_rotate %61 by %c16_i32_38 dim 1 : vector<16x256xf32>, i32 -> vector<16x256xf32>
    %c1_39 = arith.constant 1 : index
    %c0_40 = arith.constant 0 : index
    %68 = vector.load %arg2[%c1_39, %c0_40] : memref<9x256xf32, #tpu.memory_space<vmem>>, vector<1x256xf32>
    %69 = vector.broadcast %68 : vector<1x256xf32> to vector<16x256xf32>
    %70 = arith.mulf %67, %69 : vector<16x256xf32>
    %c16_41 = arith.constant 16 : index
    %c0_42 = arith.constant 0 : index
    %71 = vector.load %arg13[%c16_41, %c0_42] : memref<144x256xf32, #tpu.memory_space<vmem>>, vector<16x256xf32>
    tpu.vector_store %arg13[%c16_41, %c0_42], %70 {strides = array<i32>} : memref<144x256xf32, #tpu.memory_space<vmem>>, vector<16x256xf32>,
    %c15_i32_43 = arith.constant 15 : i32
    %72 = tpu.dynamic_rotate %61 by %c15_i32_43 dim 1 : vector<16x256xf32>, i32 -> vector<16x256xf32>
    %c2_44 = arith.constant 2 : index
    %c0_45 = arith.constant 0 : index
    %73 = vector.load %arg2[%c2_44, %c0_45] : memref<9x256xf32, #tpu.memory_space<vmem>>, vector<1x256xf32>
    %74 = vector.broadcast %73 : vector<1x256xf32> to vector<16x256xf32>
    %75 = arith.mulf %72, %74 : vector<16x256xf32>
    %c32_46 = arith.constant 32 : index
    %c0_47 = arith.constant 0 : index
    %76 = vector.load %arg13[%c32_46, %c0_47] : memref<144x256xf32, #tpu.memory_space<vmem>>, vector<16x256xf32>
    tpu.vector_store %arg13[%c32_46, %c0_47], %75 {strides = array<i32>} : memref<144x256xf32, #tpu.memory_space<vmem>>, vector<16x256xf32>,
    %c1_i32_48 = arith.constant 1 : i32
    %77 = tpu.dynamic_rotate %61 by %c1_i32_48 dim 1 : vector<16x256xf32>, i32 -> vector<16x256xf32>
    %c3_49 = arith.constant 3 : index
    %c0_50 = arith.constant 0 : index
    %78 = vector.load %arg2[%c3_49, %c0_50] : memref<9x256xf32, #tpu.memory_space<vmem>>, vector<1x256xf32>
    %79 = vector.broadcast %78 : vector<1x256xf32> to vector<16x256xf32>
    %80 = arith.mulf %77, %79 : vector<16x256xf32>
    %c48_51 = arith.constant 48 : index
    %c0_52 = arith.constant 0 : index
    %81 = vector.load %arg13[%c48_51, %c0_52] : memref<144x256xf32, #tpu.memory_space<vmem>>, vector<16x256xf32>
    tpu.vector_store %arg13[%c48_51, %c0_52], %80 {strides = array<i32>} : memref<144x256xf32, #tpu.memory_space<vmem>>, vector<16x256xf32>,
    %c4_53 = arith.constant 4 : index
    %c0_54 = arith.constant 0 : index
    %82 = vector.load %arg2[%c4_53, %c0_54] : memref<9x256xf32, #tpu.memory_space<vmem>>, vector<1x256xf32>
    %83 = vector.broadcast %82 : vector<1x256xf32> to vector<16x256xf32>
    %84 = arith.mulf %61, %83 : vector<16x256xf32>
    %c64_55 = arith.constant 64 : index
    %c0_56 = arith.constant 0 : index
    %85 = vector.load %arg13[%c64_55, %c0_56] : memref<144x256xf32, #tpu.memory_space<vmem>>, vector<16x256xf32>
    tpu.vector_store %arg13[%c64_55, %c0_56], %84 {strides = array<i32>} : memref<144x256xf32, #tpu.memory_space<vmem>>, vector<16x256xf32>,
    %c255_i32_57 = arith.constant 255 : i32
    %86 = tpu.dynamic_rotate %61 by %c255_i32_57 dim 1 : vector<16x256xf32>, i32 -> vector<16x256xf32>
    %c5_58 = arith.constant 5 : index
    %c0_59 = arith.constant 0 : index
    %87 = vector.load %arg2[%c5_58, %c0_59] : memref<9x256xf32, #tpu.memory_space<vmem>>, vector<1x256xf32>
    %88 = vector.broadcast %87 : vector<1x256xf32> to vector<16x256xf32>
    %89 = arith.mulf %86, %88 : vector<16x256xf32>
    %c80 = arith.constant 80 : index
    %c0_60 = arith.constant 0 : index
    %90 = vector.load %arg13[%c80, %c0_60] : memref<144x256xf32, #tpu.memory_space<vmem>>, vector<16x256xf32>
    tpu.vector_store %arg13[%c80, %c0_60], %89 {strides = array<i32>} : memref<144x256xf32, #tpu.memory_space<vmem>>, vector<16x256xf32>,
    %c241_i32_61 = arith.constant 241 : i32
    %91 = tpu.dynamic_rotate %61 by %c241_i32_61 dim 1 : vector<16x256xf32>, i32 -> vector<16x256xf32>
    %c6_62 = arith.constant 6 : index
    %c0_63 = arith.constant 0 : index
    %92 = vector.load %arg2[%c6_62, %c0_63] : memref<9x256xf32, #tpu.memory_space<vmem>>, vector<1x256xf32>
    %93 = vector.broadcast %92 : vector<1x256xf32> to vector<16x256xf32>
    %94 = arith.mulf %91, %93 : vector<16x256xf32>
    %c96 = arith.constant 96 : index
    %c0_64 = arith.constant 0 : index
    %95 = vector.load %arg13[%c96, %c0_64] : memref<144x256xf32, #tpu.memory_space<vmem>>, vector<16x256xf32>
    tpu.vector_store %arg13[%c96, %c0_64], %94 {strides = array<i32>} : memref<144x256xf32, #tpu.memory_space<vmem>>, vector<16x256xf32>,
    %c240_i32_65 = arith.constant 240 : i32
    %96 = tpu.dynamic_rotate %61 by %c240_i32_65 dim 1 : vector<16x256xf32>, i32 -> vector<16x256xf32>
    %c7_66 = arith.constant 7 : index
    %c0_67 = arith.constant 0 : index
    %97 = vector.load %arg2[%c7_66, %c0_67] : memref<9x256xf32, #tpu.memory_space<vmem>>, vector<1x256xf32>
    %98 = vector.broadcast %97 : vector<1x256xf32> to vector<16x256xf32>
    %99 = arith.mulf %96, %98 : vector<16x256xf32>
    %c112 = arith.constant 112 : index
    %c0_68 = arith.constant 0 : index
    %100 = vector.load %arg13[%c112, %c0_68] : memref<144x256xf32, #tpu.memory_space<vmem>>, vector<16x256xf32>
    tpu.vector_store %arg13[%c112, %c0_68], %99 {strides = array<i32>} : memref<144x256xf32, #tpu.memory_space<vmem>>, vector<16x256xf32>,
    %c239_i32_69 = arith.constant 239 : i32
    %101 = tpu.dynamic_rotate %61 by %c239_i32_69 dim 1 : vector<16x256xf32>, i32 -> vector<16x256xf32>
    %c8_70 = arith.constant 8 : index
    %c0_71 = arith.constant 0 : index
    %102 = vector.load %arg2[%c8_70, %c0_71] : memref<9x256xf32, #tpu.memory_space<vmem>>, vector<1x256xf32>
    %103 = vector.broadcast %102 : vector<1x256xf32> to vector<16x256xf32>
    %104 = arith.mulf %101, %103 : vector<16x256xf32>
    %c128 = arith.constant 128 : index
    %c0_72 = arith.constant 0 : index
    %105 = vector.load %arg13[%c128, %c0_72] : memref<144x256xf32, #tpu.memory_space<vmem>>, vector<16x256xf32>
    tpu.vector_store %arg13[%c128, %c0_72], %104 {strides = array<i32>} : memref<144x256xf32, #tpu.memory_space<vmem>>, vector<16x256xf32>,
    %c0_73 = arith.constant 0 : index
    %c0_74 = arith.constant 0 : index
    %106 = vector.load %arg13[%c0_73, %c0_74] : memref<144x256xf32, #tpu.memory_space<vmem>>, vector<144x256xf32>
    %c0_75 = arith.constant 0 : index
    %c0_76 = arith.constant 0 : index
    %107 = vector.load %arg5[%c0_75, %c0_76] : memref<16x144xf32, #tpu.memory_space<vmem>>, vector<16x144xf32>
    %cst_77 = arith.constant dense<0.000000e+00> : vector<16x256xf32>
    %108 = tpu.matmul %107, %106, %cst_77 {dimension_numbers = #tpu.dot_dimension_numbers<[1], [0], [0], [1], [0, 0, 1, 1], [], []>} : vector<16x144xf32>, vector<144x256xf32>, vector<16x256xf32> -> vector<16x256xf32>
    %c0_78 = arith.constant 0 : index
    %c0_79 = arith.constant 0 : index
    %109 = vector.load %arg6[%c0_78, %c0_79] : memref<16x1xf32, #tpu.memory_space<vmem>>, vector<16x1xf32>
    %110 = vector.broadcast %109 : vector<16x1xf32> to vector<16x256xf32>
    %111 = arith.addf %108, %110 : vector<16x256xf32>
    %c0_80 = arith.constant 0 : index
    %c0_81 = arith.constant 0 : index
    %112 = vector.load %arg10[%c0_80, %c0_81] : memref<16x1xf32, #tpu.memory_space<vmem>>, vector<16x1xf32>
    %113 = vector.broadcast %112 : vector<16x1xf32> to vector<16x256xf32>
    %114 = arith.mulf %113, %111 : vector<16x256xf32>
    %cst_82 = arith.constant 0.000000e+00 : f32
    %115 = vector.broadcast %cst_82 : f32 to vector<16x256xf32>
    %116 = arith.subf %115, %114 : vector<16x256xf32>
    %117 = math.exp %116 : vector<16x256xf32>
    %cst_83 = arith.constant 1.000000e+00 : f32
    %118 = vector.broadcast %cst_83 : f32 to vector<16x256xf32>
    %119 = arith.addf %118, %117 : vector<16x256xf32>
    %120 = tpu.reciprocal %119 {approx = true} : vector<16x256xf32> -> vector<16x256xf32>
    %121 = arith.mulf %111, %120 : vector<16x256xf32>
    %c17_i32_84 = arith.constant 17 : i32
    %122 = tpu.dynamic_rotate %121 by %c17_i32_84 dim 1 : vector<16x256xf32>, i32 -> vector<16x256xf32>
    %c0_85 = arith.constant 0 : index
    %c0_86 = arith.constant 0 : index
    %123 = vector.load %arg2[%c0_85, %c0_86] : memref<9x256xf32, #tpu.memory_space<vmem>>, vector<1x256xf32>
    %124 = vector.broadcast %123 : vector<1x256xf32> to vector<16x256xf32>
    %125 = arith.mulf %122, %124 : vector<16x256xf32>
    %c0_87 = arith.constant 0 : index
    %c0_88 = arith.constant 0 : index
    %126 = vector.load %arg13[%c0_87, %c0_88] : memref<144x256xf32, #tpu.memory_space<vmem>>, vector<16x256xf32>
    tpu.vector_store %arg13[%c0_87, %c0_88], %125 {strides = array<i32>} : memref<144x256xf32, #tpu.memory_space<vmem>>, vector<16x256xf32>,
    %c16_i32_89 = arith.constant 16 : i32
    %127 = tpu.dynamic_rotate %121 by %c16_i32_89 dim 1 : vector<16x256xf32>, i32 -> vector<16x256xf32>
    %c1_90 = arith.constant 1 : index
    %c0_91 = arith.constant 0 : index
    %128 = vector.load %arg2[%c1_90, %c0_91] : memref<9x256xf32, #tpu.memory_space<vmem>>, vector<1x256xf32>
    %129 = vector.broadcast %128 : vector<1x256xf32> to vector<16x256xf32>
    %130 = arith.mulf %127, %129 : vector<16x256xf32>
    %c16_92 = arith.constant 16 : index
    %c0_93 = arith.constant 0 : index
    %131 = vector.load %arg13[%c16_92, %c0_93] : memref<144x256xf32, #tpu.memory_space<vmem>>, vector<16x256xf32>
    tpu.vector_store %arg13[%c16_92, %c0_93], %130 {strides = array<i32>} : memref<144x256xf32, #tpu.memory_space<vmem>>, vector<16x256xf32>,
    %c15_i32_94 = arith.constant 15 : i32
    %132 = tpu.dynamic_rotate %121 by %c15_i32_94 dim 1 : vector<16x256xf32>, i32 -> vector<16x256xf32>
    %c2_95 = arith.constant 2 : index
    %c0_96 = arith.constant 0 : index
    %133 = vector.load %arg2[%c2_95, %c0_96] : memref<9x256xf32, #tpu.memory_space<vmem>>, vector<1x256xf32>
    %134 = vector.broadcast %133 : vector<1x256xf32> to vector<16x256xf32>
    %135 = arith.mulf %132, %134 : vector<16x256xf32>
    %c32_97 = arith.constant 32 : index
    %c0_98 = arith.constant 0 : index
    %136 = vector.load %arg13[%c32_97, %c0_98] : memref<144x256xf32, #tpu.memory_space<vmem>>, vector<16x256xf32>
    tpu.vector_store %arg13[%c32_97, %c0_98], %135 {strides = array<i32>} : memref<144x256xf32, #tpu.memory_space<vmem>>, vector<16x256xf32>,
    %c1_i32_99 = arith.constant 1 : i32
    %137 = tpu.dynamic_rotate %121 by %c1_i32_99 dim 1 : vector<16x256xf32>, i32 -> vector<16x256xf32>
    %c3_100 = arith.constant 3 : index
    %c0_101 = arith.constant 0 : index
    %138 = vector.load %arg2[%c3_100, %c0_101] : memref<9x256xf32, #tpu.memory_space<vmem>>, vector<1x256xf32>
    %139 = vector.broadcast %138 : vector<1x256xf32> to vector<16x256xf32>
    %140 = arith.mulf %137, %139 : vector<16x256xf32>
    %c48_102 = arith.constant 48 : index
    %c0_103 = arith.constant 0 : index
    %141 = vector.load %arg13[%c48_102, %c0_103] : memref<144x256xf32, #tpu.memory_space<vmem>>, vector<16x256xf32>
    tpu.vector_store %arg13[%c48_102, %c0_103], %140 {strides = array<i32>} : memref<144x256xf32, #tpu.memory_space<vmem>>, vector<16x256xf32>,
    %c4_104 = arith.constant 4 : index
    %c0_105 = arith.constant 0 : index
    %142 = vector.load %arg2[%c4_104, %c0_105] : memref<9x256xf32, #tpu.memory_space<vmem>>, vector<1x256xf32>
    %143 = vector.broadcast %142 : vector<1x256xf32> to vector<16x256xf32>
    %144 = arith.mulf %121, %143 : vector<16x256xf32>
    %c64_106 = arith.constant 64 : index
    %c0_107 = arith.constant 0 : index
    %145 = vector.load %arg13[%c64_106, %c0_107] : memref<144x256xf32, #tpu.memory_space<vmem>>, vector<16x256xf32>
    tpu.vector_store %arg13[%c64_106, %c0_107], %144 {strides = array<i32>} : memref<144x256xf32, #tpu.memory_space<vmem>>, vector<16x256xf32>,
    %c255_i32_108 = arith.constant 255 : i32
    %146 = tpu.dynamic_rotate %121 by %c255_i32_108 dim 1 : vector<16x256xf32>, i32 -> vector<16x256xf32>
    %c5_109 = arith.constant 5 : index
    %c0_110 = arith.constant 0 : index
    %147 = vector.load %arg2[%c5_109, %c0_110] : memref<9x256xf32, #tpu.memory_space<vmem>>, vector<1x256xf32>
    %148 = vector.broadcast %147 : vector<1x256xf32> to vector<16x256xf32>
    %149 = arith.mulf %146, %148 : vector<16x256xf32>
    %c80_111 = arith.constant 80 : index
    %c0_112 = arith.constant 0 : index
    %150 = vector.load %arg13[%c80_111, %c0_112] : memref<144x256xf32, #tpu.memory_space<vmem>>, vector<16x256xf32>
    tpu.vector_store %arg13[%c80_111, %c0_112], %149 {strides = array<i32>} : memref<144x256xf32, #tpu.memory_space<vmem>>, vector<16x256xf32>,
    %c241_i32_113 = arith.constant 241 : i32
    %151 = tpu.dynamic_rotate %121 by %c241_i32_113 dim 1 : vector<16x256xf32>, i32 -> vector<16x256xf32>
    %c6_114 = arith.constant 6 : index
    %c0_115 = arith.constant 0 : index
    %152 = vector.load %arg2[%c6_114, %c0_115] : memref<9x256xf32, #tpu.memory_space<vmem>>, vector<1x256xf32>
    %153 = vector.broadcast %152 : vector<1x256xf32> to vector<16x256xf32>
    %154 = arith.mulf %151, %153 : vector<16x256xf32>
    %c96_116 = arith.constant 96 : index
    %c0_117 = arith.constant 0 : index
    %155 = vector.load %arg13[%c96_116, %c0_117] : memref<144x256xf32, #tpu.memory_space<vmem>>, vector<16x256xf32>
    tpu.vector_store %arg13[%c96_116, %c0_117], %154 {strides = array<i32>} : memref<144x256xf32, #tpu.memory_space<vmem>>, vector<16x256xf32>,
    %c240_i32_118 = arith.constant 240 : i32
    %156 = tpu.dynamic_rotate %121 by %c240_i32_118 dim 1 : vector<16x256xf32>, i32 -> vector<16x256xf32>
    %c7_119 = arith.constant 7 : index
    %c0_120 = arith.constant 0 : index
    %157 = vector.load %arg2[%c7_119, %c0_120] : memref<9x256xf32, #tpu.memory_space<vmem>>, vector<1x256xf32>
    %158 = vector.broadcast %157 : vector<1x256xf32> to vector<16x256xf32>
    %159 = arith.mulf %156, %158 : vector<16x256xf32>
    %c112_121 = arith.constant 112 : index
    %c0_122 = arith.constant 0 : index
    %160 = vector.load %arg13[%c112_121, %c0_122] : memref<144x256xf32, #tpu.memory_space<vmem>>, vector<16x256xf32>
    tpu.vector_store %arg13[%c112_121, %c0_122], %159 {strides = array<i32>} : memref<144x256xf32, #tpu.memory_space<vmem>>, vector<16x256xf32>,
    %c239_i32_123 = arith.constant 239 : i32
    %161 = tpu.dynamic_rotate %121 by %c239_i32_123 dim 1 : vector<16x256xf32>, i32 -> vector<16x256xf32>
    %c8_124 = arith.constant 8 : index
    %c0_125 = arith.constant 0 : index
    %162 = vector.load %arg2[%c8_124, %c0_125] : memref<9x256xf32, #tpu.memory_space<vmem>>, vector<1x256xf32>
    %163 = vector.broadcast %162 : vector<1x256xf32> to vector<16x256xf32>
    %164 = arith.mulf %161, %163 : vector<16x256xf32>
    %c128_126 = arith.constant 128 : index
    %c0_127 = arith.constant 0 : index
    %165 = vector.load %arg13[%c128_126, %c0_127] : memref<144x256xf32, #tpu.memory_space<vmem>>, vector<16x256xf32>
    tpu.vector_store %arg13[%c128_126, %c0_127], %164 {strides = array<i32>} : memref<144x256xf32, #tpu.memory_space<vmem>>, vector<16x256xf32>,
    %c0_128 = arith.constant 0 : index
    %c0_129 = arith.constant 0 : index
    %166 = vector.load %arg13[%c0_128, %c0_129] : memref<144x256xf32, #tpu.memory_space<vmem>>, vector<144x256xf32>
    %c0_130 = arith.constant 0 : index
    %c0_131 = arith.constant 0 : index
    %167 = vector.load %arg7[%c0_130, %c0_131] : memref<16x144xf32, #tpu.memory_space<vmem>>, vector<16x144xf32>
    %cst_132 = arith.constant dense<0.000000e+00> : vector<16x256xf32>
    %168 = tpu.matmul %167, %166, %cst_132 {dimension_numbers = #tpu.dot_dimension_numbers<[1], [0], [0], [1], [0, 0, 1, 1], [], []>} : vector<16x144xf32>, vector<144x256xf32>, vector<16x256xf32> -> vector<16x256xf32>
    %c0_133 = arith.constant 0 : index
    %c0_134 = arith.constant 0 : index
    %169 = vector.load %arg8[%c0_133, %c0_134] : memref<16x1xf32, #tpu.memory_space<vmem>>, vector<16x1xf32>
    %170 = vector.broadcast %169 : vector<16x1xf32> to vector<16x256xf32>
    %171 = arith.addf %168, %170 : vector<16x256xf32>
    %172 = vector.extract_strided_slice %171 {offsets = [0, 0], sizes = [8, 256], strides = [1, 1]} : vector<16x256xf32> to vector<8x256xf32>
    %173 = vector.extract_strided_slice %171 {offsets = [8, 0], sizes = [8, 256], strides = [1, 1]} : vector<16x256xf32> to vector<8x256xf32>
    %174 = arith.addf %172, %173 : vector<8x256xf32>
    %cst_135 = arith.constant 0.000000e+00 : f32
    %175 = vector.broadcast %cst_135 : f32 to vector<8x256xf32>
    %176 = arith.subf %175, %174 : vector<8x256xf32>
    %177 = math.exp %176 : vector<8x256xf32>
    %cst_136 = arith.constant 1.000000e+00 : f32
    %178 = vector.broadcast %cst_136 : f32 to vector<8x256xf32>
    %179 = arith.addf %178, %177 : vector<8x256xf32>
    %180 = tpu.reciprocal %179 {approx = true} : vector<8x256xf32> -> vector<8x256xf32>
    %181 = arith.mulf %174, %180 : vector<8x256xf32>
    %182 = arith.addf %181, %1 : vector<8x256xf32>
    %c0_137 = arith.constant 0 : index
    %c0_138 = arith.constant 0 : index
    %c0_139 = arith.constant 0 : index
    %183 = vector.load %arg11[%c0_137, %c0_138, %c0_139] : memref<1x8x256xf32, #tpu.memory_space<vmem>>, vector<1x8x256xf32>
    %184 = vector.shape_cast %183 : vector<1x8x256xf32> to vector<8x256xf32>
    %185 = vector.shape_cast %182 : vector<8x256xf32> to vector<1x8x256xf32>
    tpu.vector_store %arg11[%c0_137, %c0_138, %c0_139], %185 {strides = array<i32>} : memref<1x8x256xf32, #tpu.memory_space<vmem>>, vector<1x8x256xf32>,
    %186 = vector.extract_strided_slice %51 {offsets = [0, 0], sizes = [8, 256], strides = [1, 1]} : vector<16x256xf32> to vector<8x256xf32>
    %c0_140 = arith.constant 0 : index
    %c0_141 = arith.constant 0 : index
    %c0_142 = arith.constant 0 : index
    %187 = vector.load %arg12[%c0_140, %c0_141, %c0_142] : memref<1x8x256xf32, #tpu.memory_space<vmem>>, vector<1x8x256xf32>
    %188 = vector.shape_cast %187 : vector<1x8x256xf32> to vector<8x256xf32>
    %189 = vector.shape_cast %186 : vector<8x256xf32> to vector<1x8x256xf32>
    tpu.vector_store %arg12[%c0_140, %c0_141, %c0_142], %189 {strides = array<i32>} : memref<1x8x256xf32, #tpu.memory_space<vmem>>, vector<1x8x256xf32>,
    return
  }
  func.func @transform_0(%arg0: i32) -> (i32, i32, i32) {
    %c0_i32 = arith.constant 0 : i32
    %c0_i32_0 = arith.constant 0 : i32
    %c0_i32_1 = arith.constant 0 : i32
    return %arg0, %c0_i32, %c0_i32_0 : i32, i32, i32
  }
  func.func @transform_1(%arg0: i32) -> (i32, i32) {
    %c0_i32 = arith.constant 0 : i32
    %c0_i32_0 = arith.constant 0 : i32
    %c0_i32_1 = arith.constant 0 : i32
    return %c0_i32, %c0_i32_0 : i32, i32
  }
  func.func @transform_2(%arg0: i32) -> (i32, i32) {
    %c0_i32 = arith.constant 0 : i32
    %c0_i32_0 = arith.constant 0 : i32
    %c0_i32_1 = arith.constant 0 : i32
    return %c0_i32, %c0_i32_0 : i32, i32
  }
  func.func @transform_3(%arg0: i32) -> (i32, i32) {
    %c0_i32 = arith.constant 0 : i32
    %c0_i32_0 = arith.constant 0 : i32
    %c0_i32_1 = arith.constant 0 : i32
    return %c0_i32, %c0_i32_0 : i32, i32
  }
  func.func @transform_4(%arg0: i32) -> (i32, i32) {
    %c0_i32 = arith.constant 0 : i32
    %c0_i32_0 = arith.constant 0 : i32
    %c0_i32_1 = arith.constant 0 : i32
    return %c0_i32, %c0_i32_0 : i32, i32
  }
  func.func @transform_5(%arg0: i32) -> (i32, i32) {
    %c0_i32 = arith.constant 0 : i32
    %c0_i32_0 = arith.constant 0 : i32
    %c0_i32_1 = arith.constant 0 : i32
    return %c0_i32, %c0_i32_0 : i32, i32
  }
  func.func @transform_6(%arg0: i32) -> (i32, i32) {
    %c0_i32 = arith.constant 0 : i32
    %c0_i32_0 = arith.constant 0 : i32
    %c0_i32_1 = arith.constant 0 : i32
    return %c0_i32, %c0_i32_0 : i32, i32
  }
  func.func @transform_7(%arg0: i32) -> (i32, i32) {
    %c0_i32 = arith.constant 0 : i32
    %c0_i32_0 = arith.constant 0 : i32
    %c0_i32_1 = arith.constant 0 : i32
    return %c0_i32, %c0_i32_0 : i32, i32
  }
  func.func @transform_8(%arg0: i32) -> (i32, i32) {
    %c0_i32 = arith.constant 0 : i32
    %c0_i32_0 = arith.constant 0 : i32
    %c0_i32_1 = arith.constant 0 : i32
    return %c0_i32, %c0_i32_0 : i32, i32
  }
  func.func @transform_9(%arg0: i32) -> (i32, i32) {
    %c0_i32 = arith.constant 0 : i32
    %c0_i32_0 = arith.constant 0 : i32
    %c0_i32_1 = arith.constant 0 : i32
    return %c0_i32, %c0_i32_0 : i32, i32
  }
  func.func @transform_10(%arg0: i32) -> (i32, i32, i32) {
    %c0_i32 = arith.constant 0 : i32
    %c0_i32_0 = arith.constant 0 : i32
    %c0_i32_1 = arith.constant 0 : i32
    return %arg0, %c0_i32, %c0_i32_0 : i32, i32, i32
  }
  func.func @transform_11(%arg0: i32) -> (i32, i32, i32) {
    %c0_i32 = arith.constant 0 : i32
    %c0_i32_0 = arith.constant 0 : i32
    %c0_i32_1 = arith.constant 0 : i32
    return %arg0, %c0_i32, %c0_i32_0 : i32, i32, i32
  }
}

</mosaic_0001>

<llo_original>
// kernel: spab2_forward_pallas.1
$region0: #{spab2_forward_pallas.1}
  #allocation0 [shape = 'u32[]', space=smem, size = 0x4, offset = 0x4, fixed_abs, tag = 'smem constant byte address 0x4 - core index']
  #allocation1 [shape = 'u32[144,128]{1,0:T(1,128)}', space=vmem, size = 0x12000, scoped, tag = 'internal scratch']
  #allocation2 [shape = 'f32[144,256]{1,0:T(8,128)}', space=vmem, size = 0x24000, scoped, tag = 'scratch operand']
  %s0 = inlined_call_operand.vmem [shape: f32[2,8,256], index: 0, kind: input, shape index: {}]
  %s1 = inlined_call_operand.vmem [shape: f32[9,256], index: 1, kind: input, shape index: {}]
  %s2 = inlined_call_operand.vmem [shape: f32[16,72], index: 2, kind: input, shape index: {}]
  %s3 = inlined_call_operand.vmem [shape: f32[16,1], index: 3, kind: input, shape index: {}]
  %s4 = inlined_call_operand.vmem [shape: f32[16,144], index: 4, kind: input, shape index: {}]
  %s5 = inlined_call_operand.vmem [shape: f32[16,1], index: 5, kind: input, shape index: {}]
  %s6 = inlined_call_operand.vmem [shape: f32[16,144], index: 6, kind: input, shape index: {}]
  %s7 = inlined_call_operand.vmem [shape: f32[16,1], index: 7, kind: input, shape index: {}]
  %s8 = inlined_call_operand.vmem [shape: f32[16,1], index: 8, kind: input, shape index: {}]
  %s9 = inlined_call_operand.vmem [shape: f32[16,1], index: 9, kind: input, shape index: {}]
  %s10 = inlined_call_operand.vmem [shape: f32[2,8,256], index: 10, kind: output, shape index: {0}]
  %s11 = inlined_call_operand.vmem [shape: f32[2,8,256], index: 11, kind: output, shape index: {1}]
  %12 = xla_tuple %s10, %s11
  %s13 = sld [smem:[#allocation0]]
  $region81: #{spab2_forward_pallas.1} parent=0
    _
  %s15 = ssub.s32 1, %s13
  %s16 = scalar_select 0, %s15, %s13
  loop: start=0, step=1, limit=4
  $region2: #{spab2_forward_pallas.1} parent=0 // loop_pre_header
    _
  $region3: #{spab2_forward_pallas.1} parent=0 // loop_header
    %s18 = sphi 0, %s22
    %p19 = scmp.ge.s32.totalorder %s18, 4
    %s28 = sphi 0, %s30
    %s31 = sphi 0, %s28
    %s32 = sphi 0, %s31
    %s48 = sphi 0, %s32
    %s52 = sphi 0, %s52
    %s54 = sphi 0, %s52
    %s55 = sphi 0, %s54
    %s69 = sphi 0, %s55
    %s73 = sphi 0, %s73
    %s75 = sphi 0, %s73
    %s76 = sphi 0, %s75
    %s90 = sphi 0, %s76
    %s94 = sphi 0, %s94
    %s96 = sphi 0, %s94
    %s97 = sphi 0, %s96
    %s111 = sphi 0, %s97
    %s115 = sphi 0, %s115
    %s117 = sphi 0, %s115
    %s118 = sphi 0, %s117
    %s132 = sphi 0, %s118
    %s136 = sphi 0, %s136
    %s138 = sphi 0, %s136
    %s139 = sphi 0, %s138
    %s153 = sphi 0, %s139
    %s157 = sphi 0, %s157
    %s159 = sphi 0, %s157
    %s160 = sphi 0, %s159
    %s174 = sphi 0, %s160
    %s178 = sphi 0, %s178
    %s180 = sphi 0, %s178
    %s181 = sphi 0, %s180
    %s195 = sphi 0, %s181
    %s199 = sphi 0, %s199
    %s201 = sphi 0, %s199
    %s202 = sphi 0, %s201
    %s216 = sphi 0, %s202
    %s220 = sphi 0, %s220
    %s222 = sphi 0, %s220
    %s223 = sphi 0, %s222
    %s237 = sphi 0, %s223
    %s243 = sphi 0, %s245
    %s246 = sphi 0, %s243
    %s247 = sphi 0, %s246
    %s263 = sphi 0, %s247
    %s269 = sphi 0, %s271
    %s272 = sphi 0, %s269
    %s273 = sphi 0, %s272
    %s289 = sphi 0, %s273
  $region4: #{spab2_forward_pallas.1} parent=0 // loop_header_branch
    %21 = sbr.rel (%p19) target = $region8
  $region5: #{spab2_forward_pallas.1} parent=0 // loop_body
    %s23 = ssub.s32 %s18, 1
    %s24 = ssub.s32 %s18, 2
    %s25 = sadd.s32 %s18, 1
    %s26 = ssub.s32 %s18, %s25
    %p27 = scmp.eq.s32.totalorder %s26, 0
    %s29 = sadd.s32 %s28, 1
    %s30 = scalar_select %p27, %s28, %s29
    %p33 = pneg %p27
    %p34 = scmp.eq.s32.totalorder %s18, 1
    %p35 = por %p33, %p34
    %p36 = scmp.ne.s32.totalorder %s28, %s31
    %p37 = scmp.eq.s32.totalorder %s18, 0
    %p38 = por %p36, %p37
    %p39 = scmp.ne.s32.totalorder %s28, %s31
    %p40 = scmp.eq.s32.totalorder %s23, 1
    %p41 = por %p39, %p40
    %p42 = scmp.ne.s32.totalorder %s31, %s32
    %p43 = scmp.eq.s32.totalorder %s23, 0
    %p44 = por %p42, %p43
    %p45 = scmp.ne.s32.totalorder %s31, %s32
    %p46 = scmp.eq.s32.totalorder %s24, 1
    %p47 = por %p45, %p46
    %p49 = scmp.ne.s32.totalorder %s32, %s48
    %p50 = scmp.eq.s32.totalorder %s24, 0
    %p51 = por %p49, %p50
    %s53 = sadd.s32 %s52, 1
    %p56 = scmp.eq.s32.totalorder %s18, 1
    %p57 = scmp.ne.s32.totalorder %s52, %s54
    %p58 = scmp.eq.s32.totalorder %s18, 0
    %p59 = por %p57, %p58
    %p60 = scmp.ne.s32.totalorder %s52, %s54
    %p61 = scmp.eq.s32.totalorder %s23, 1
    %p62 = por %p60, %p61
    %p63 = scmp.ne.s32.totalorder %s54, %s55
    %p64 = scmp.eq.s32.totalorder %s23, 0
    %p65 = por %p63, %p64
    %p66 = scmp.ne.s32.totalorder %s54, %s55
    %p67 = scmp.eq.s32.totalorder %s24, 1
    %p68 = por %p66, %p67
    %p70 = scmp.ne.s32.totalorder %s55, %s69
    %p71 = scmp.eq.s32.totalorder %s24, 0
    %p72 = por %p70, %p71
    %s74 = sadd.s32 %s73, 1
    %p77 = scmp.eq.s32.totalorder %s18, 1
    %p78 = scmp.ne.s32.totalorder %s73, %s75
    %p79 = scmp.eq.s32.totalorder %s18, 0
    %p80 = por %p78, %p79
    %p81 = scmp.ne.s32.totalorder %s73, %s75
    %p82 = scmp.eq.s32.totalorder %s23, 1
    %p83 = por %p81, %p82
    %p84 = scmp.ne.s32.totalorder %s75, %s76
    %p85 = scmp.eq.s32.totalorder %s23, 0
    %p86 = por %p84, %p85
    %p87 = scmp.ne.s32.totalorder %s75, %s76
    %p88 = scmp.eq.s32.totalorder %s24, 1
    %p89 = por %p87, %p88
    %p91 = scmp.ne.s32.totalorder %s76, %s90
    %p92 = scmp.eq.s32.totalorder %s24, 0
    %p93 = por %p91, %p92
    %s95 = sadd.s32 %s94, 1
    %p98 = scmp.eq.s32.totalorder %s18, 1
    %p99 = scmp.ne.s32.totalorder %s94, %s96
    %p100 = scmp.eq.s32.totalorder %s18, 0
    %p101 = por %p99, %p100
    %p102 = scmp.ne.s32.totalorder %s94, %s96
    %p103 = scmp.eq.s32.totalorder %s23, 1
    %p104 = por %p102, %p103
    %p105 = scmp.ne.s32.totalorder %s96, %s97
    %p106 = scmp.eq.s32.totalorder %s23, 0
    %p107 = por %p105, %p106
    %p108 = scmp.ne.s32.totalorder %s96, %s97
    %p109 = scmp.eq.s32.totalorder %s24, 1
    %p110 = por %p108, %p109
    %p112 = scmp.ne.s32.totalorder %s97, %s111
    %p113 = scmp.eq.s32.totalorder %s24, 0
    %p114 = por %p112, %p113
    %s116 = sadd.s32 %s115, 1
    %p119 = scmp.eq.s32.totalorder %s18, 1
    %p120 = scmp.ne.s32.totalorder %s115, %s117
    %p121 = scmp.eq.s32.totalorder %s18, 0
    %p122 = por %p120, %p121
    %p123 = scmp.ne.s32.totalorder %s115, %s117
    %p124 = scmp.eq.s32.totalorder %s23, 1
    %p125 = por %p123, %p124
    %p126 = scmp.ne.s32.totalorder %s117, %s118
    %p127 = scmp.eq.s32.totalorder %s23, 0
    %p128 = por %p126, %p127
    %p129 = scmp.ne.s32.totalorder %s117, %s118
    %p130 = scmp.eq.s32.totalorder %s24, 1
    %p131 = por %p129, %p130
    %p133 = scmp.ne.s32.totalorder %s118, %s132
    %p134 = scmp.eq.s32.totalorder %s24, 0
    %p135 = por %p133, %p134
    %s137 = sadd.s32 %s136, 1
    %p140 = scmp.eq.s32.totalorder %s18, 1
    %p141 = scmp.ne.s32.totalorder %s136, %s138
    %p142 = scmp.eq.s32.totalorder %s18, 0
    %p143 = por %p141, %p142
    %p144 = scmp.ne.s32.totalorder %s136, %s138
    %p145 = scmp.eq.s32.totalorder %s23, 1
    %p146 = por %p144, %p145
    %p147 = scmp.ne.s32.totalorder %s138, %s139
    %p148 = scmp.eq.s32.totalorder %s23, 0
    %p149 = por %p147, %p148
    %p150 = scmp.ne.s32.totalorder %s138, %s139
    %p151 = scmp.eq.s32.totalorder %s24, 1
    %p152 = por %p150, %p151
    %p154 = scmp.ne.s32.totalorder %s139, %s153
    %p155 = scmp.eq.s32.totalorder %s24, 0
    %p156 = por %p154, %p155
    %s158 = sadd.s32 %s157, 1
    %p161 = scmp.eq.s32.totalorder %s18, 1
    %p162 = scmp.ne.s32.totalorder %s157, %s159
    %p163 = scmp.eq.s32.totalorder %s18, 0
    %p164 = por %p162, %p163
    %p165 = scmp.ne.s32.totalorder %s157, %s159
    %p166 = scmp.eq.s32.totalorder %s23, 1
    %p167 = por %p165, %p166
    %p168 = scmp.ne.s32.totalorder %s159, %s160
    %p169 = scmp.eq.s32.totalorder %s23, 0
    %p170 = por %p168, %p169
    %p171 = scmp.ne.s32.totalorder %s159, %s160
    %p172 = scmp.eq.s32.totalorder %s24, 1
    %p173 = por %p171, %p172
    %p175 = scmp.ne.s32.totalorder %s160, %s174
    %p176 = scmp.eq.s32.totalorder %s24, 0
    %p177 = por %p175, %p176
    %s179 = sadd.s32 %s178, 1
    %p182 = scmp.eq.s32.totalorder %s18, 1
    %p183 = scmp.ne.s32.totalorder %s178, %s180
    %p184 = scmp.eq.s32.totalorder %s18, 0
    %p185 = por %p183, %p184
    %p186 = scmp.ne.s32.totalorder %s178, %s180
    %p187 = scmp.eq.s32.totalorder %s23, 1
    %p188 = por %p186, %p187
    %p189 = scmp.ne.s32.totalorder %s180, %s181
    %p190 = scmp.eq.s32.totalorder %s23, 0
    %p191 = por %p189, %p190
    %p192 = scmp.ne.s32.totalorder %s180, %s181
    %p193 = scmp.eq.s32.totalorder %s24, 1
    %p194 = por %p192, %p193
    %p196 = scmp.ne.s32.totalorder %s181, %s195
    %p197 = scmp.eq.s32.totalorder %s24, 0
    %p198 = por %p196, %p197
    %s200 = sadd.s32 %s199, 1
    %p203 = scmp.eq.s32.totalorder %s18, 1
    %p204 = scmp.ne.s32.totalorder %s199, %s201
    %p205 = scmp.eq.s32.totalorder %s18, 0
    %p206 = por %p204, %p205
    %p207 = scmp.ne.s32.totalorder %s199, %s201
    %p208 = scmp.eq.s32.totalorder %s23, 1
    %p209 = por %p207, %p208
    %p210 = scmp.ne.s32.totalorder %s201, %s202
    %p211 = scmp.eq.s32.totalorder %s23, 0
    %p212 = por %p210, %p211
    %p213 = scmp.ne.s32.totalorder %s201, %s202
    %p214 = scmp.eq.s32.totalorder %s24, 1
    %p215 = por %p213, %p214
    %p217 = scmp.ne.s32.totalorder %s202, %s216
    %p218 = scmp.eq.s32.totalorder %s24, 0
    %p219 = por %p217, %p218
    %s221 = sadd.s32 %s220, 1
    %p224 = scmp.eq.s32.totalorder %s18, 1
    %p225 = scmp.ne.s32.totalorder %s220, %s222
    %p226 = scmp.eq.s32.totalorder %s18, 0
    %p227 = por %p225, %p226
    %p228 = scmp.ne.s32.totalorder %s220, %s222
    %p229 = scmp.eq.s32.totalorder %s23, 1
    %p230 = por %p228, %p229
    %p231 = scmp.ne.s32.totalorder %s222, %s223
    %p232 = scmp.eq.s32.totalorder %s23, 0
    %p233 = por %p231, %p232
    %p234 = scmp.ne.s32.totalorder %s222, %s223
    %p235 = scmp.eq.s32.totalorder %s24, 1
    %p236 = por %p234, %p235
    %p238 = scmp.ne.s32.totalorder %s223, %s237
    %p239 = scmp.eq.s32.totalorder %s24, 0
    %p240 = por %p238, %p239
    %s241 = ssub.s32 %s18, %s25
    %p242 = scmp.eq.s32.totalorder %s241, 0
    %s244 = sadd.s32 %s243, 1
    %s245 = scalar_select %p242, %s243, %s244
    %p248 = pneg %p242
    %p249 = scmp.eq.s32.totalorder %s18, 1
    %p250 = por %p248, %p249
    %p251 = scmp.ne.s32.totalorder %s243, %s246
    %p252 = scmp.eq.s32.totalorder %s18, 0
    %p253 = por %p251, %p252
    %p254 = scmp.ne.s32.totalorder %s243, %s246
    %p255 = scmp.eq.s32.totalorder %s23, 1
    %p256 = por %p254, %p255
    %p257 = scmp.ne.s32.totalorder %s246, %s247
    %p258 = scmp.eq.s32.totalorder %s23, 0
    %p259 = por %p257, %p258
    %p260 = scmp.ne.s32.totalorder %s246, %s247
    %p261 = scmp.eq.s32.totalorder %s24, 1
    %p262 = por %p260, %p261
    %p264 = scmp.ne.s32.totalorder %s247, %s263
    %p265 = scmp.eq.s32.totalorder %s24, 0
    %p266 = por %p264, %p265
    %s267 = ssub.s32 %s18, %s25
    %p268 = scmp.eq.s32.totalorder %s267, 0
    %s270 = sadd.s32 %s269, 1
    %s271 = scalar_select %p268, %s269, %s270
    %p274 = pneg %p268
    %p275 = scmp.eq.s32.totalorder %s18, 1
    %p276 = por %p274, %p275
    %p277 = scmp.ne.s32.totalorder %s269, %s272
    %p278 = scmp.eq.s32.totalorder %s18, 0
    %p279 = por %p277, %p278
    %p280 = scmp.ne.s32.totalorder %s269, %s272
    %p281 = scmp.eq.s32.totalorder %s23, 1
    %p282 = por %p280, %p281
    %p283 = scmp.ne.s32.totalorder %s272, %s273
    %p284 = scmp.eq.s32.totalorder %s23, 0
    %p285 = por %p283, %p284
    %p286 = scmp.ne.s32.totalorder %s272, %s273
    %p287 = scmp.eq.s32.totalorder %s24, 1
    %p288 = por %p286, %p287
    %p290 = scmp.ne.s32.totalorder %s273, %s289
    %p291 = scmp.eq.s32.totalorder %s24, 0
    %p292 = por %p290, %p291
    %p293 = scmp.le.s32.totalorder 1, %s18
    %p294 = scmp.lt.s32.totalorder %s18, 3
    %p295 = pnand %p293, %p294
    %p296 = pneg %p295
    // Predicated region
    $region9: #{spab2_forward_pallas.1} parent=5 // pred_check
      _
    $region10: #{spab2_forward_pallas.1} parent=5 // pred_check_branch
      %298 = sbr.rel (%p295) target = $region12
    $region11: #{spab2_forward_pallas.1} parent=5 // pred_region
      %s299 = ssub.s32 %s18, 1
      // Predicated region
      $region13: #{spab2_forward_pallas.1} parent=11 // pred_check
        %p300 = pneg %p65
      $region14: #{spab2_forward_pallas.1} parent=11 // pred_check_branch
        %302 = sbr.rel (%p300) target = $region16
      $region15: #{spab2_forward_pallas.1} parent=11 // pred_region
        _
      $region16: #{spab2_forward_pallas.1} parent=11 // pred_fallthru
        _
      // Predicated region
      $region17: #{spab2_forward_pallas.1} parent=11 // pred_check
        %p303 = pneg %p86
      $region18: #{spab2_forward_pallas.1} parent=11 // pred_check_branch
        %305 = sbr.rel (%p303) target = $region20
      $region19: #{spab2_forward_pallas.1} parent=11 // pred_region
        _
      $region20: #{spab2_forward_pallas.1} parent=11 // pred_fallthru
        _
      // Predicated region
      $region21: #{spab2_forward_pallas.1} parent=11 // pred_check
        %p306 = pneg %p107
      $region22: #{spab2_forward_pallas.1} parent=11 // pred_check_branch
        %308 = sbr.rel (%p306) target = $region24
      $region23: #{spab2_forward_pallas.1} parent=11 // pred_region
        _
      $region24: #{spab2_forward_pallas.1} parent=11 // pred_fallthru
        _
      // Predicated region
      $region25: #{spab2_forward_pallas.1} parent=11 // pred_check
        %p309 = pneg %p128
      $region26: #{spab2_forward_pallas.1} parent=11 // pred_check_branch
        %311 = sbr.rel (%p309) target = $region28
      $region27: #{spab2_forward_pallas.1} parent=11 // pred_region
        _
      $region28: #{spab2_forward_pallas.1} parent=11 // pred_fallthru
        _
      // Predicated region
      $region29: #{spab2_forward_pallas.1} parent=11 // pred_check
        %p312 = pneg %p149
      $region30: #{spab2_forward_pallas.1} parent=11 // pred_check_branch
        %314 = sbr.rel (%p312) target = $region32
      $region31: #{spab2_forward_pallas.1} parent=11 // pred_region
        _
      $region32: #{spab2_forward_pallas.1} parent=11 // pred_fallthru
        _
      // Predicated region
      $region33: #{spab2_forward_pallas.1} parent=11 // pred_check
        %p315 = pneg %p170
      $region34: #{spab2_forward_pallas.1} parent=11 // pred_check_branch
        %317 = sbr.rel (%p315) target = $region36
      $region35: #{spab2_forward_pallas.1} parent=11 // pred_region
        _
      $region36: #{spab2_forward_pallas.1} parent=11 // pred_fallthru
        _
      // Predicated region
      $region37: #{spab2_forward_pallas.1} parent=11 // pred_check
        %p318 = pneg %p191
      $region38: #{spab2_forward_pallas.1} parent=11 // pred_check_branch
        %320 = sbr.rel (%p318) target = $region40
      $region39: #{spab2_forward_pallas.1} parent=11 // pred_region
        _
      $region40: #{spab2_forward_pallas.1} parent=11 // pred_fallthru
        _
      // Predicated region
      $region41: #{spab2_forward_pallas.1} parent=11 // pred_check
        %p321 = pneg %p212
      $region42: #{spab2_forward_pallas.1} parent=11 // pred_check_branch
        %323 = sbr.rel (%p321) target = $region44
      $region43: #{spab2_forward_pallas.1} parent=11 // pred_region
        _
      $region44: #{spab2_forward_pallas.1} parent=11 // pred_fallthru
        _
      // Predicated region
      $region45: #{spab2_forward_pallas.1} parent=11 // pred_check
        %p324 = pneg %p233
      $region46: #{spab2_forward_pallas.1} parent=11 // pred_check_branch
        %326 = sbr.rel (%p324) target = $region48
      $region47: #{spab2_forward_pallas.1} parent=11 // pred_region
        _
      $region48: #{spab2_forward_pallas.1} parent=11 // pred_fallthru
        _
    $region12: #{spab2_forward_pallas.1} parent=5 // pred_fallthru
      _
    %p327 = scmp.lt.s32.totalorder %s18, 2
    // Predicated region
    $region49: #{spab2_forward_pallas.1} parent=5 // pred_check
      %p328 = pneg %p327
    $region50: #{spab2_forward_pallas.1} parent=5 // pred_check_branch
      %330 = sbr.rel (%p328) target = $region52
    $region51: #{spab2_forward_pallas.1} parent=5 // pred_region
      // Predicated region
      $region53: #{spab2_forward_pallas.1} parent=51 // pred_check
        %p331 = pneg %p38
      $region54: #{spab2_forward_pallas.1} parent=51 // pred_check_branch
        %333 = sbr.rel (%p331) target = $region56
      $region55: #{spab2_forward_pallas.1} parent=51 // pred_region
        %p334 = scmp.lt.s32.totalorder %s18, 1
        %s335 = scalar_select %p334, %s18, 1
        %s336 = smul.addr %s335, 2
        %s337 = smul.addr %s336, 8
        %s338 = scalar_lea.vmem %s0, %s337
      $region56: #{spab2_forward_pallas.1} parent=51 // pred_fallthru
        _
    $region52: #{spab2_forward_pallas.1} parent=5 // pred_fallthru
      _
    %p339 = scmp.le.s32.totalorder 1, %s18
    %p340 = scmp.lt.s32.totalorder %s18, 3
    %p341 = pnand %p339, %p340
    %p342 = pneg %p341
    // Predicated region
    $region57: #{spab2_forward_pallas.1} parent=5 // pred_check
      _
    $region58: #{spab2_forward_pallas.1} parent=5 // pred_check_branch
      %344 = sbr.rel (%p341) target = $region60
    $region59: #{spab2_forward_pallas.1} parent=5 // pred_region
      %s345 = ssub.s32 %s18, 1
      %p346 = scmp.lt.s32.totalorder %s23, 1
      %s347 = scalar_select %p346, %s23, 1
      %s348 = smul.addr %s347, 2
      %s349 = smul.addr %s348, 8
      %s350 = scalar_lea.vmem %s0, %s349
      %p351 = pneg %p44
      %p352 = pneg %p41
      %p353 = pneg %p65
      %p354 = pneg %p62
      %p355 = pneg %p86
      %p356 = pneg %p83
      %p357 = pneg %p107
      %p358 = pneg %p104
      %p359 = pneg %p128
      %p360 = pneg %p125
      %p361 = pneg %p149
      %p362 = pneg %p146
      %p363 = pneg %p170
      %p364 = pneg %p167
      %p365 = pneg %p191
      %p366 = pneg %p188
      %p367 = pneg %p212
      %p368 = pneg %p209
      %p369 = pneg %p233
      %p370 = pneg %p230
      %p371 = pneg %p259
      %p372 = pneg %p256
      %p373 = scmp.lt.s32.totalorder %s23, 1
      %s374 = scalar_select %p373, %s23, 1
      %s375 = smul.addr %s374, 2
      %s376 = smul.addr %s375, 8
      %s377 = scalar_lea.vmem %s10, %s376
      %p378 = pneg %p285
      %p379 = pneg %p282
      %p380 = scmp.lt.s32.totalorder %s23, 1
      %s381 = scalar_select %p380, %s23, 1
      %s382 = smul.addr %s381, 2
      %s383 = smul.addr %s382, 8
      %s384 = scalar_lea.vmem %s11, %s383
      %p385 = scmp.lt.s32.totalorder %s23, 1
      %s386 = scalar_select %p385, %s23, 1
      %s387 = smul.addr %s386, 2
      %s388 = smul.addr %s387, 8
      %s389 = scalar_lea.vmem %s0, %s388
      %p390 = scmp.lt.s32.totalorder %s23, 1
      %s391 = scalar_select %p390, %s23, 1
      %s392 = smul.addr %s391, 2
      %s393 = smul.addr %s392, 8
      %s394 = scalar_lea.vmem %s10, %s393
      %p395 = scmp.lt.s32.totalorder %s23, 1
      %s396 = scalar_select %p395, %s23, 1
      %s397 = smul.addr %s396, 2
      %s398 = smul.addr %s397, 8
      %s399 = scalar_lea.vmem %s11, %s398
      %v400 = vld [vmem:[%s389] sm:$0xff]
      %v401 = vld [vmem:[%s389 + $0x8] sm:$0xff]
      %402 = vrot.lane.b32.xlu0 %v400, 17
      %v403 = vpop.permute.xlu0 %402
      %404 = vrot.lane.b32.xlu0 %v401, 17
      %v405 = vpop.permute.xlu0 %404
      %v406 = vlaneseq
      %v407 = vand.u32 %v406, 127
      %vm408 = vcmp.lt.s32.totalorder %v407, 17
      %v409 = vsel %vm408, %v403, %v405
      %v410 = vsel %vm408, %v405, %v403
      %v411 = vld [vmem:[%s1] ss:$8 sm:$0x3]
      %v413 = vlaneseq
      %v414 = vshrl.u32 %v413, 7
      %v415 = vsub.s32 0, %v414
      %v416 = vrot.slane %v411, %v415
      %v417 = vlaneseq
      %v418 = vshrl.u32 %v417, 7
      %v419 = vsub.s32 1, %v418
      %v420 = vrot.slane %v411, %v419
      %v423 = vmul.f32 %v410, %v416
      %v424 = vmul.f32 %v409, %v420
      %425 = vst [vmem:[#allocation2] sm:$0xff] %v423
      %426 = vst [vmem:[#allocation2 + $0x8] sm:$0xff] %v424
      %427 = vrot.lane.b32.xlu0 %v400, 16
      %v428 = vpop.permute.xlu0 %427
      %429 = vrot.lane.b32.xlu0 %v401, 16
      %v430 = vpop.permute.xlu0 %429
      %vm431 = vcmp.lt.s32.totalorder %v407, 16
      %v432 = vsel %vm431, %v428, %v430
      %v433 = vsel %vm431, %v430, %v428
      %s434 = scalar_lea.vmem %s1, 1
      %v435 = vld [vmem:[%s434] ss:$8 sm:$0x3]
      %v437 = vlaneseq
      %v438 = vshrl.u32 %v437, 7
      %v439 = vsub.s32 0, %v438
      %v440 = vrot.slane %v435, %v439
      %v441 = vlaneseq
      %v442 = vshrl.u32 %v441, 7
      %v443 = vsub.s32 1, %v442
      %v444 = vrot.slane %v435, %v443
      %v447 = vmul.f32 %v433, %v440
      %v448 = vmul.f32 %v432, %v444
      %449 = vst [vmem:[#allocation2 + $0x10] sm:$0xff] %v447
      %450 = vst [vmem:[#allocation2 + $0x18] sm:$0xff] %v448
      %451 = vrot.lane.b32.xlu0 %v400, 15
      %v452 = vpop.permute.xlu0 %451
      %453 = vrot.lane.b32.xlu0 %v401, 15
      %v454 = vpop.permute.xlu0 %453
      %vm455 = vcmp.lt.s32.totalorder %v407, 15
      %v456 = vsel %vm455, %v452, %v454
      %v457 = vsel %vm455, %v454, %v452
      %s458 = scalar_lea.vmem %s1, 2
      %v459 = vld [vmem:[%s458] ss:$8 sm:$0x3]
      %v461 = vlaneseq
      %v462 = vshrl.u32 %v461, 7
      %v463 = vsub.s32 0, %v462
      %v464 = vrot.slane %v459, %v463
      %v465 = vlaneseq
      %v466 = vshrl.u32 %v465, 7
      %v467 = vsub.s32 1, %v466
      %v468 = vrot.slane %v459, %v467
      %v471 = vmul.f32 %v457, %v464
      %v472 = vmul.f32 %v456, %v468
      %473 = vst [vmem:[#allocation2 + $0x20] sm:$0xff] %v471
      %474 = vst [vmem:[#allocation2 + $0x28] sm:$0xff] %v472
      %475 = vrot.lane.b32.xlu0 %v400, 1
      %v476 = vpop.permute.xlu0 %475
      %477 = vrot.lane.b32.xlu0 %v401, 1
      %v478 = vpop.permute.xlu0 %477
      %vm479 = vcmp.lt.s32.totalorder %v407, 1
      %v480 = vsel %vm479, %v476, %v478
      %v481 = vsel %vm479, %v478, %v476
      %s482 = scalar_lea.vmem %s1, 3
      %v483 = vld [vmem:[%s482] ss:$8 sm:$0x3]
      %v485 = vlaneseq
      %v486 = vshrl.u32 %v485, 7
      %v487 = vsub.s32 0, %v486
      %v488 = vrot.slane %v483, %v487
      %v489 = vlaneseq
      %v490 = vshrl.u32 %v489, 7
      %v491 = vsub.s32 1, %v490
      %v492 = vrot.slane %v483, %v491
      %v495 = vmul.f32 %v481, %v488
      %v496 = vmul.f32 %v480, %v492
      %497 = vst [vmem:[#allocation2 + $0x30] sm:$0xff] %v495
      %498 = vst [vmem:[#allocation2 + $0x38] sm:$0xff] %v496
      %s499 = scalar_lea.vmem %s1, 4
      %v500 = vld [vmem:[%s499] ss:$8 sm:$0x3]
      %v502 = vlaneseq
      %v503 = vshrl.u32 %v502, 7
      %v504 = vsub.s32 0, %v503
      %v505 = vrot.slane %v500, %v504
      %v506 = vlaneseq
      %v507 = vshrl.u32 %v506, 7
      %v508 = vsub.s32 1, %v507
      %v509 = vrot.slane %v500, %v508
      %v512 = vmul.f32 %v400, %v505
      %v513 = vmul.f32 %v401, %v509
      %514 = vst [vmem:[#allocation2 + $0x40] sm:$0xff] %v512
      %515 = vst [vmem:[#allocation2 + $0x48] sm:$0xff] %v513
      %516 = vrot.lane.b32.xlu0 %v400, 127
      %v517 = vpop.permute.xlu0 %516
      %518 = vrot.lane.b32.xlu0 %v401, 127
      %v519 = vpop.permute.xlu0 %518
      %vm520 = vcmp.lt.s32.totalorder %v407, 127
      %v521 = vsel %vm520, %v517, %v519
      %v522 = vsel %vm520, %v519, %v517
      %s523 = scalar_lea.vmem %s1, 5
      %v524 = vld [vmem:[%s523] ss:$8 sm:$0x3]
      %v526 = vlaneseq
      %v527 = vshrl.u32 %v526, 7
      %v528 = vsub.s32 0, %v527
      %v529 = vrot.slane %v524, %v528
      %v530 = vlaneseq
      %v531 = vshrl.u32 %v530, 7
      %v532 = vsub.s32 1, %v531
      %v533 = vrot.slane %v524, %v532
      %v536 = vmul.f32 %v521, %v529
      %v537 = vmul.f32 %v522, %v533
      %538 = vst [vmem:[#allocation2 + $0x50] sm:$0xff] %v536
      %539 = vst [vmem:[#allocation2 + $0x58] sm:$0xff] %v537
      %540 = vrot.lane.b32.xlu0 %v400, 113
      %v541 = vpop.permute.xlu0 %540
      %542 = vrot.lane.b32.xlu0 %v401, 113
      %v543 = vpop.permute.xlu0 %542
      %vm544 = vcmp.lt.s32.totalorder %v407, 113
      %v545 = vsel %vm544, %v541, %v543
      %v546 = vsel %vm544, %v543, %v541
      %s547 = scalar_lea.vmem %s1, 6
      %v548 = vld [vmem:[%s547] ss:$8 sm:$0x3]
      %v550 = vlaneseq
      %v551 = vshrl.u32 %v550, 7
      %v552 = vsub.s32 0, %v551
      %v553 = vrot.slane %v548, %v552
      %v554 = vlaneseq
      %v555 = vshrl.u32 %v554, 7
      %v556 = vsub.s32 1, %v555
      %v557 = vrot.slane %v548, %v556
      %v560 = vmul.f32 %v545, %v553
      %v561 = vmul.f32 %v546, %v557
      %562 = vst [vmem:[#allocation2 + $0x60] sm:$0xff] %v560
      %563 = vst [vmem:[#allocation2 + $0x68] sm:$0xff] %v561
      %564 = vrot.lane.b32.xlu0 %v400, 112
      %v565 = vpop.permute.xlu0 %564
      %566 = vrot.lane.b32.xlu0 %v401, 112
      %v567 = vpop.permute.xlu0 %566
      %vm568 = vcmp.lt.s32.totalorder %v407, 112
      %v569 = vsel %vm568, %v565, %v567
      %v570 = vsel %vm568, %v567, %v565
      %s571 = scalar_lea.vmem %s1, 7
      %v572 = vld [vmem:[%s571] ss:$8 sm:$0x3]
      %v574 = vlaneseq
      %v575 = vshrl.u32 %v574, 7
      %v576 = vsub.s32 0, %v575
      %v577 = vrot.slane %v572, %v576
      %v578 = vlaneseq
      %v579 = vshrl.u32 %v578, 7
      %v580 = vsub.s32 1, %v579
      %v581 = vrot.slane %v572, %v580
      %v584 = vmul.f32 %v569, %v577
      %v585 = vmul.f32 %v570, %v581
      %586 = vst [vmem:[#allocation2 + $0x70] sm:$0xff] %v584
      %587 = vst [vmem:[#allocation2 + $0x78] sm:$0xff] %v585
      %588 = vrot.lane.b32.xlu0 %v400, 111
      %v589 = vpop.permute.xlu0 %588
      %590 = vrot.lane.b32.xlu0 %v401, 111
      %v591 = vpop.permute.xlu0 %590
      %vm592 = vcmp.lt.s32.totalorder %v407, 111
      %v593 = vsel %vm592, %v589, %v591
      %v594 = vsel %vm592, %v591, %v589
      %s595 = scalar_lea.vmem %s1, 16
      %v596 = vld [vmem:[%s595] ss:$8 sm:$0x3]
      %v598 = vlaneseq
      %v599 = vshrl.u32 %v598, 7
      %v600 = vsub.s32 0, %v599
      %v601 = vrot.slane %v596, %v600
      %v602 = vlaneseq
      %v603 = vshrl.u32 %v602, 7
      %v604 = vsub.s32 1, %v603
      %v605 = vrot.slane %v596, %v604
      %v608 = vmul.f32 %v593, %v601
      %v609 = vmul.f32 %v594, %v605
      %610 = vst [vmem:[#allocation2 + $0x80] sm:$0xff] %v608
      %611 = vst [vmem:[#allocation2 + $0x88] sm:$0xff] %v609
      %v612 = vld [vmem:[#allocation2] sm:$0xff]
      %v613 = vld [vmem:[#allocation2 + $0x8] sm:$0xff]
      %v614 = vld [vmem:[#allocation2 + $0x10] sm:$0xff]
      %v615 = vld [vmem:[#allocation2 + $0x18] sm:$0xff]
      %v616 = vld [vmem:[#allocation2 + $0x20] sm:$0xff]
      %v617 = vld [vmem:[#allocation2 + $0x28] sm:$0xff]
      %v618 = vld [vmem:[#allocation2 + $0x30] sm:$0xff]
      %v619 = vld [vmem:[#allocation2 + $0x38] sm:$0xff]
      %v620 = vld [vmem:[#allocation2 + $0x40] sm:$0xff]
      %v621 = vld [vmem:[#allocation2 + $0x48] sm:$0xff]
      %v622 = vld [vmem:[#allocation2 + $0x50] sm:$0xff]
      %v623 = vld [vmem:[#allocation2 + $0x58] sm:$0xff]
      %v624 = vld [vmem:[#allocation2 + $0x60] sm:$0xff]
      %v625 = vld [vmem:[#allocation2 + $0x68] sm:$0xff]
      %v626 = vld [vmem:[#allocation2 + $0x70] sm:$0xff]
      %v627 = vld [vmem:[#allocation2 + $0x78] sm:$0xff]
      %v628 = vld [vmem:[#allocation2 + $0x80] sm:$0xff]
      %v629 = vld [vmem:[#allocation2 + $0x88] sm:$0xff]
      %v630 = vld [vmem:[%s2] sm:$0xff]
      %v631 = vld [vmem:[%s2 + $0x8] sm:$0xff]
      %v632 = vld [vmem:[%s3] sm:$0xff]
      %v633 = vld [vmem:[%s3 + $0x8] sm:$0xff]
      %635 = vset.pattern.permute.xlu0 0
      %636 = vperm.xlu0 %635, %v632
      %v637 = vpop.permute.xlu0 %636
      %640 = vset.pattern.permute.xlu0 0
      %641 = vperm.xlu0 %640, %v633
      %v642 = vpop.permute.xlu0 %641
      %vm644 = vcmask 588800
      %v646 = vsel %vm644, %v630, 0
      %v649 = vsel %vm644, %v631, 0
      %651 = vmatprep.subr.mxu0 0.0
      %652 = vmatpush1.msra.mxu0 0.0
      %653 = vmatprep.subr.mxu0 0.0
      %654 = vmatpush1.msra.mxu0 0.0
      %655 = vmatprep.subr.mxu0 0.0
      %656 = vmatpush1.msra.mxu0 0.0
      %657 = vmatprep.subr.mxu0 0.0
      %658 = vmatpush1.msra.mxu0 0.0
      %659 = vmatprep.subr.mxu0 0.0
      %660 = vmatpush1.msra.mxu0 0.0
      %661 = vmatprep.subr.mxu0 0.0
      %662 = vmatpush1.msra.mxu0 0.0
      %663 = vmatprep.subr.mxu0 0.0
      %664 = vmatpush1.msra.mxu0 0.0
      %665 = vmatprep.subr.mxu0 %v629
      %666 = vmatpush1.msra.mxu0 %v628
      %667 = vmatprep.subr.mxu0 %v627
      %668 = vmatpush1.msra.mxu0 %v626
      %669 = vmatprep.subr.mxu0 %v625
      %670 = vmatpush1.msra.mxu0 %v624
      %671 = vmatprep.subr.mxu0 %v623
      %672 = vmatpush1.msra.mxu0 %v622
      %673 = vmatprep.subr.mxu0 %v621
      %674 = vmatpush1.msra.mxu0 %v620
      %675 = vmatprep.subr.mxu0 %v619
      %676 = vmatpush1.msra.mxu0 %v618
      %677 = vmatprep.subr.mxu0 %v617
      %678 = vmatpush1.msra.mxu0 %v616
      %679 = vmatprep.subr.mxu0 %v615
      %680 = vmatpush1.msra.mxu0 %v614
      %681 = vmatprep.subr.mxu0 %v613
      %682 = vmatpush1.msra.mxu0 %v612
      %683 = vmatprep.subr.mxu0 0.0
      %684 = vmatpush2.msra.mxu0 0.0
      %685 = vmatprep.subr.mxu0 0.0
      %686 = vmatpush2.msra.mxu0 0.0
      %687 = vmatprep.subr.mxu0 0.0
      %688 = vmatpush2.msra.mxu0 0.0
      %689 = vmatprep.subr.mxu0 0.0
      %690 = vmatpush2.msra.mxu0 0.0
      %691 = vmatprep.subr.mxu0 0.0
      %692 = vmatpush2.msra.mxu0 0.0
      %693 = vmatprep.subr.mxu0 0.0
      %694 = vmatpush2.msra.mxu0 0.0
      %695 = vmatprep.subr.mxu0 0.0
      %696 = vmatpush2.msra.mxu0 0.0
      %697 = vmatprep.subr.mxu0 0.0
      %698 = vmatpush2.msra.mxu0 0.0
      %699 = vmatprep.subr.mxu0 0.0
      %700 = vmatpush2.msra.mxu0 0.0
      %701 = vmatprep.subr.mxu0 0.0
      %702 = vmatpush2.msra.mxu0 0.0
      %703 = vmatprep.subr.mxu0 0.0
      %704 = vmatpush2.msra.mxu0 0.0
      %705 = vmatprep.subr.mxu0 0.0
      %706 = vmatpush2.msra.mxu0 0.0
      %707 = vmatprep.subr.mxu0 0.0
      %708 = vmatpush2.msra.mxu0 0.0
      %709 = vmatprep.subr.mxu0 0.0
      %710 = vmatpush2.msra.mxu0 0.0
      %711 = vmatprep.subr.mxu0 0.0
      %712 = vmatpush2.msra.mxu0 0.0
      %713 = vmatprep.subr.mxu0 0.0
      %714 = vmatpush2.msra.mxu0 0.0
      %715 = vmatprep.mubr.f32.mxu0 0.0
      %716 = vmatmul.mubr.f32.gmra.mxu0 %v646
      %v717 = vpop.f32.mrf.mxu0
      %v718 = vadd.f32 %v637, %v717
      %v719 = vpop.f32.mrf.mxu0
      %v720 = vadd.f32 %v637, %v719
      %721 = vmatprep.mubr.f32.mxu0 0.0
      %722 = vmatmul.mubr.f32.gmra.mxu0 %v649
      %v723 = vpop.f32.mrf.mxu0
      %v724 = vadd.f32 %v642, %v723
      %v725 = vpop.f32.mrf.mxu0
      %v726 = vadd.f32 %v642, %v725
      %727 = vdwg.mxu0
      %v728 = vld [vmem:[%s8] sm:$0xff]
      %v729 = vld [vmem:[%s8 + $0x8] sm:$0xff]
      %731 = vset.pattern.permute.xlu0 0
      %732 = vperm.xlu0 %731, %v728
      %v733 = vpop.permute.xlu0 %732
      %736 = vset.pattern.permute.xlu0 0
      %737 = vperm.xlu0 %736, %v729
      %v738 = vpop.permute.xlu0 %737
      %v740 = vmul.f32 %v733, %v718
      %v741 = vmul.f32 %v733, %v720
      %v742 = vmul.f32 %v738, %v724
      %v743 = vmul.f32 %v738, %v726
      %v744 = vsub.f32 0.0, %v740
      %v745 = vsub.f32 0.0, %v741
      %v746 = vsub.f32 0.0, %v742
      %v747 = vsub.f32 0.0, %v743
      %v748 = vmul.f32 %v744, 1.442695
      %v749 = vpow.pop %v748
      %v750 = vmul.f32 %v745, 1.442695
      %v751 = vpow.pop %v750
      %v752 = vmul.f32 %v746, 1.442695
      %v753 = vpow.pop %v752
      %v754 = vmul.f32 %v747, 1.442695
      %v755 = vpow.pop %v754
      %v756 = vadd.f32 %v749, 1.0
      %v757 = vadd.f32 %v751, 1.0
      %v758 = vadd.f32 %v753, 1.0
      %v759 = vadd.f32 %v755, 1.0
      %v760 = vrcp.pop %v756
      %v761 = vrcp.pop %v757
      %v762 = vrcp.pop %v758
      %v763 = vrcp.pop %v759
      %v764 = vmul.f32 %v718, %v760
      %v765 = vmul.f32 %v720, %v761
      %v766 = vmul.f32 %v724, %v762
      %v767 = vmul.f32 %v726, %v763
      %768 = vrot.lane.b32.xlu0 %v764, 17
      %v769 = vpop.permute.xlu0 %768
      %770 = vrot.lane.b32.xlu0 %v766, 17
      %v771 = vpop.permute.xlu0 %770
      %772 = vrot.lane.b32.xlu0 %v765, 17
      %v773 = vpop.permute.xlu0 %772
      %774 = vrot.lane.b32.xlu0 %v767, 17
      %v775 = vpop.permute.xlu0 %774
      %v776 = vsel %vm408, %v769, %v773
      %v777 = vsel %vm408, %v771, %v775
      %v778 = vsel %vm408, %v773, %v769
      %v779 = vsel %vm408, %v775, %v771
      %v780 = vld [vmem:[%s1] ss:$8 sm:$0x3]
      %v782 = vlaneseq
      %v783 = vshrl.u32 %v782, 7
      %v784 = vsub.s32 0, %v783
      %v785 = vrot.slane %v780, %v784
      %v786 = vlaneseq
      %v787 = vshrl.u32 %v786, 7
      %v788 = vsub.s32 1, %v787
      %v789 = vrot.slane %v780, %v788
      %v792 = vmul.f32 %v778, %v785
      %v793 = vmul.f32 %v776, %v789
      %v794 = vmul.f32 %v779, %v785
      %v795 = vmul.f32 %v777, %v789
      %796 = vst [vmem:[#allocation2] sm:$0xff] %v792
      %797 = vst [vmem:[#allocation2 + $0x8] sm:$0xff] %v793
      %798 = vst [vmem:[#allocation2 + $0x10] sm:$0xff] %v794
      %799 = vst [vmem:[#allocation2 + $0x18] sm:$0xff] %v795
      %800 = vrot.lane.b32.xlu0 %v764, 16
      %v801 = vpop.permute.xlu0 %800
      %802 = vrot.lane.b32.xlu0 %v766, 16
      %v803 = vpop.permute.xlu0 %802
      %804 = vrot.lane.b32.xlu0 %v765, 16
      %v805 = vpop.permute.xlu0 %804
      %806 = vrot.lane.b32.xlu0 %v767, 16
      %v807 = vpop.permute.xlu0 %806
      %v808 = vsel %vm431, %v801, %v805
      %v809 = vsel %vm431, %v803, %v807
      %v810 = vsel %vm431, %v805, %v801
      %v811 = vsel %vm431, %v807, %v803
      %v812 = vld [vmem:[%s434] ss:$8 sm:$0x3]
      %v814 = vlaneseq
      %v815 = vshrl.u32 %v814, 7
      %v816 = vsub.s32 0, %v815
      %v817 = vrot.slane %v812, %v816
      %v818 = vlaneseq
      %v819 = vshrl.u32 %v818, 7
      %v820 = vsub.s32 1, %v819
      %v821 = vrot.slane %v812, %v820
      %v824 = vmul.f32 %v810, %v817
      %v825 = vmul.f32 %v808, %v821
      %v826 = vmul.f32 %v811, %v817
      %v827 = vmul.f32 %v809, %v821
      %828 = vst [vmem:[#allocation2 + $0x20] sm:$0xff] %v824
      %829 = vst [vmem:[#allocation2 + $0x28] sm:$0xff] %v825
      %830 = vst [vmem:[#allocation2 + $0x30] sm:$0xff] %v826
      %831 = vst [vmem:[#allocation2 + $0x38] sm:$0xff] %v827
      %832 = vrot.lane.b32.xlu0 %v764, 15
      %v833 = vpop.permute.xlu0 %832
      %834 = vrot.lane.b32.xlu0 %v766, 15
      %v835 = vpop.permute.xlu0 %834
      %836 = vrot.lane.b32.xlu0 %v765, 15
      %v837 = vpop.permute.xlu0 %836
      %838 = vrot.lane.b32.xlu0 %v767, 15
      %v839 = vpop.permute.xlu0 %838
      %v840 = vsel %vm455, %v833, %v837
      %v841 = vsel %vm455, %v835, %v839
      %v842 = vsel %vm455, %v837, %v833
      %v843 = vsel %vm455, %v839, %v835
      %v844 = vld [vmem:[%s458] ss:$8 sm:$0x3]
      %v846 = vlaneseq
      %v847 = vshrl.u32 %v846, 7
      %v848 = vsub.s32 0, %v847
      %v849 = vrot.slane %v844, %v848
      %v850 = vlaneseq
      %v851 = vshrl.u32 %v850, 7
      %v852 = vsub.s32 1, %v851
      %v853 = vrot.slane %v844, %v852
      %v856 = vmul.f32 %v842, %v849
      %v857 = vmul.f32 %v840, %v853
      %v858 = vmul.f32 %v843, %v849
      %v859 = vmul.f32 %v841, %v853
      %860 = vst [vmem:[#allocation2 + $0x40] sm:$0xff] %v856
      %861 = vst [vmem:[#allocation2 + $0x48] sm:$0xff] %v857
      %862 = vst [vmem:[#allocation2 + $0x50] sm:$0xff] %v858
      %863 = vst [vmem:[#allocation2 + $0x58] sm:$0xff] %v859
      %864 = vrot.lane.b32.xlu0 %v764, 1
      %v865 = vpop.permute.xlu0 %864
      %866 = vrot.lane.b32.xlu0 %v766, 1
      %v867 = vpop.permute.xlu0 %866
      %868 = vrot.lane.b32.xlu0 %v765, 1
      %v869 = vpop.permute.xlu0 %868
      %870 = vrot.lane.b32.xlu0 %v767, 1
      %v871 = vpop.permute.xlu0 %870
      %v872 = vsel %vm479, %v865, %v869
      %v873 = vsel %vm479, %v867, %v871
      %v874 = vsel %vm479, %v869, %v865
      %v875 = vsel %vm479, %v871, %v867
      %v876 = vld [vmem:[%s482] ss:$8 sm:$0x3]
      %v878 = vlaneseq
      %v879 = vshrl.u32 %v878, 7
      %v880 = vsub.s32 0, %v879
      %v881 = vrot.slane %v876, %v880
      %v882 = vlaneseq
      %v883 = vshrl.u32 %v882, 7
      %v884 = vsub.s32 1, %v883
      %v885 = vrot.slane %v876, %v884
      %v888 = vmul.f32 %v874, %v881
      %v889 = vmul.f32 %v872, %v885
      %v890 = vmul.f32 %v875, %v881
      %v891 = vmul.f32 %v873, %v885
      %892 = vst [vmem:[#allocation2 + $0x60] sm:$0xff] %v888
      %893 = vst [vmem:[#allocation2 + $0x68] sm:$0xff] %v889
      %894 = vst [vmem:[#allocation2 + $0x70] sm:$0xff] %v890
      %895 = vst [vmem:[#allocation2 + $0x78] sm:$0xff] %v891
      %v896 = vld [vmem:[%s499] ss:$8 sm:$0x3]
      %v898 = vlaneseq
      %v899 = vshrl.u32 %v898, 7
      %v900 = vsub.s32 0, %v899
      %v901 = vrot.slane %v896, %v900
      %v902 = vlaneseq
      %v903 = vshrl.u32 %v902, 7
      %v904 = vsub.s32 1, %v903
      %v905 = vrot.slane %v896, %v904
      %v908 = vmul.f32 %v764, %v901
      %v909 = vmul.f32 %v765, %v905
      %v910 = vmul.f32 %v766, %v901
      %v911 = vmul.f32 %v767, %v905
      %912 = vst [vmem:[#allocation2 + $0x80] sm:$0xff] %v908
      %913 = vst [vmem:[#allocation2 + $0x88] sm:$0xff] %v909
      %914 = vst [vmem:[#allocation2 + $0x90] sm:$0xff] %v910
      %915 = vst [vmem:[#allocation2 + $0x98] sm:$0xff] %v911
      %916 = vrot.lane.b32.xlu0 %v764, 127
      %v917 = vpop.permute.xlu0 %916
      %918 = vrot.lane.b32.xlu0 %v766, 127
      %v919 = vpop.permute.xlu0 %918
      %920 = vrot.lane.b32.xlu0 %v765, 127
      %v921 = vpop.permute.xlu0 %920
      %922 = vrot.lane.b32.xlu0 %v767, 127
      %v923 = vpop.permute.xlu0 %922
      %v924 = vsel %vm520, %v917, %v921
      %v925 = vsel %vm520, %v919, %v923
      %v926 = vsel %vm520, %v921, %v917
      %v927 = vsel %vm520, %v923, %v919
      %v928 = vld [vmem:[%s523] ss:$8 sm:$0x3]
      %v930 = vlaneseq
      %v931 = vshrl.u32 %v930, 7
      %v932 = vsub.s32 0, %v931
      %v933 = vrot.slane %v928, %v932
      %v934 = vlaneseq
      %v935 = vshrl.u32 %v934, 7
      %v936 = vsub.s32 1, %v935
      %v937 = vrot.slane %v928, %v936
      %v940 = vmul.f32 %v924, %v933
      %v941 = vmul.f32 %v926, %v937
      %v942 = vmul.f32 %v925, %v933
      %v943 = vmul.f32 %v927, %v937
      %944 = vst [vmem:[#allocation2 + $0xa0] sm:$0xff] %v940
      %945 = vst [vmem:[#allocation2 + $0xa8] sm:$0xff] %v941
      %946 = vst [vmem:[#allocation2 + $0xb0] sm:$0xff] %v942
      %947 = vst [vmem:[#allocation2 + $0xb8] sm:$0xff] %v943
      %948 = vrot.lane.b32.xlu0 %v764, 113
      %v949 = vpop.permute.xlu0 %948
      %950 = vrot.lane.b32.xlu0 %v766, 113
      %v951 = vpop.permute.xlu0 %950
      %952 = vrot.lane.b32.xlu0 %v765, 113
      %v953 = vpop.permute.xlu0 %952
      %954 = vrot.lane.b32.xlu0 %v767, 113
      %v955 = vpop.permute.xlu0 %954
      %v956 = vsel %vm544, %v949, %v953
      %v957 = vsel %vm544, %v951, %v955
      %v958 = vsel %vm544, %v953, %v949
      %v959 = vsel %vm544, %v955, %v951
      %v960 = vld [vmem:[%s547] ss:$8 sm:$0x3]
      %v962 = vlaneseq
      %v963 = vshrl.u32 %v962, 7
      %v964 = vsub.s32 0, %v963
      %v965 = vrot.slane %v960, %v964
      %v966 = vlaneseq
      %v967 = vshrl.u32 %v966, 7
      %v968 = vsub.s32 1, %v967
      %v969 = vrot.slane %v960, %v968
      %v972 = vmul.f32 %v956, %v965
      %v973 = vmul.f32 %v958, %v969
      %v974 = vmul.f32 %v957, %v965
      %v975 = vmul.f32 %v959, %v969
      %976 = vst [vmem:[#allocation2 + $0xc0] sm:$0xff] %v972
      %977 = vst [vmem:[#allocation2 + $0xc8] sm:$0xff] %v973
      %978 = vst [vmem:[#allocation2 + $0xd0] sm:$0xff] %v974
      %979 = vst [vmem:[#allocation2 + $0xd8] sm:$0xff] %v975
      %980 = vrot.lane.b32.xlu0 %v764, 112
      %v981 = vpop.permute.xlu0 %980
      %982 = vrot.lane.b32.xlu0 %v766, 112
      %v983 = vpop.permute.xlu0 %982
      %984 = vrot.lane.b32.xlu0 %v765, 112
      %v985 = vpop.permute.xlu0 %984
      %986 = vrot.lane.b32.xlu0 %v767, 112
      %v987 = vpop.permute.xlu0 %986
      %v988 = vsel %vm568, %v981, %v985
      %v989 = vsel %vm568, %v983, %v987
      %v990 = vsel %vm568, %v985, %v981
      %v991 = vsel %vm568, %v987, %v983
      %v992 = vld [vmem:[%s571] ss:$8 sm:$0x3]
      %v994 = vlaneseq
      %v995 = vshrl.u32 %v994, 7
      %v996 = vsub.s32 0, %v995
      %v997 = vrot.slane %v992, %v996
      %v998 = vlaneseq
      %v999 = vshrl.u32 %v998, 7
      %v1000 = vsub.s32 1, %v999
      %v1001 = vrot.slane %v992, %v1000
      %v1004 = vmul.f32 %v988, %v997
      %v1005 = vmul.f32 %v990, %v1001
      %v1006 = vmul.f32 %v989, %v997
      %v1007 = vmul.f32 %v991, %v1001
      %1008 = vst [vmem:[#allocation2 + $0xe0] sm:$0xff] %v1004
      %1009 = vst [vmem:[#allocation2 + $0xe8] sm:$0xff] %v1005
      %1010 = vst [vmem:[#allocation2 + $0xf0] sm:$0xff] %v1006
      %1011 = vst [vmem:[#allocation2 + $0xf8] sm:$0xff] %v1007
      %1012 = vrot.lane.b32.xlu0 %v764, 111
      %v1013 = vpop.permute.xlu0 %1012
      %1014 = vrot.lane.b32.xlu0 %v766, 111
      %v1015 = vpop.permute.xlu0 %1014
      %1016 = vrot.lane.b32.xlu0 %v765, 111
      %v1017 = vpop.permute.xlu0 %1016
      %1018 = vrot.lane.b32.xlu0 %v767, 111
      %v1019 = vpop.permute.xlu0 %1018
      %v1020 = vsel %vm592, %v1013, %v1017
      %v1021 = vsel %vm592, %v1015, %v1019
      %v1022 = vsel %vm592, %v1017, %v1013
      %v1023 = vsel %vm592, %v1019, %v1015
      %v1024 = vld [vmem:[%s595] ss:$8 sm:$0x3]
      %v1026 = vlaneseq
      %v1027 = vshrl.u32 %v1026, 7
      %v1028 = vsub.s32 0, %v1027
      %v1029 = vrot.slane %v1024, %v1028
      %v1030 = vlaneseq
      %v1031 = vshrl.u32 %v1030, 7
      %v1032 = vsub.s32 1, %v1031
      %v1033 = vrot.slane %v1024, %v1032
      %v1036 = vmul.f32 %v1020, %v1029
      %v1037 = vmul.f32 %v1022, %v1033
      %v1038 = vmul.f32 %v1021, %v1029
      %v1039 = vmul.f32 %v1023, %v1033
      %1040 = vst [vmem:[#allocation2 + $0x100] sm:$0xff] %v1036
      %1041 = vst [vmem:[#allocation2 + $0x108] sm:$0xff] %v1037
      %1042 = vst [vmem:[#allocation2 + $0x110] sm:$0xff] %v1038
      %1043 = vst [vmem:[#allocation2 + $0x118] sm:$0xff] %v1039
      %v1044 = vld [vmem:[#allocation2] sm:$0xff]
      %v1045 = vld [vmem:[#allocation2 + $0x8] sm:$0xff]
      %v1046 = vld [vmem:[#allocation2 + $0x10] sm:$0xff]
      %v1047 = vld [vmem:[#allocation2 + $0x18] sm:$0xff]
      %v1048 = vld [vmem:[#allocation2 + $0x20] sm:$0xff]
      %v1049 = vld [vmem:[#allocation2 + $0x28] sm:$0xff]
      %v1050 = vld [vmem:[#allocation2 + $0x30] sm:$0xff]
      %v1051 = vld [vmem:[#allocation2 + $0x38] sm:$0xff]
      %v1052 = vld [vmem:[#allocation2 + $0x40] sm:$0xff]
      %v1053 = vld [vmem:[#allocation2 + $0x48] sm:$0xff]
      %v1054 = vld [vmem:[#allocation2 + $0x50] sm:$0xff]
      %v1055 = vld [vmem:[#allocation2 + $0x58] sm:$0xff]
      %v1056 = vld [vmem:[#allocation2 + $0x60] sm:$0xff]
      %v1057 = vld [vmem:[#allocation2 + $0x68] sm:$0xff]
      %v1058 = vld [vmem:[#allocation2 + $0x70] sm:$0xff]
      %v1059 = vld [vmem:[#allocation2 + $0x78] sm:$0xff]
      %v1060 = vld [vmem:[#allocation2 + $0x80] sm:$0xff]
      %v1061 = vld [vmem:[#allocation2 + $0x88] sm:$0xff]
      %v1062 = vld [vmem:[#allocation2 + $0x90] sm:$0xff]
      %v1063 = vld [vmem:[#allocation2 + $0x98] sm:$0xff]
      %v1064 = vld [vmem:[#allocation2 + $0xa0] sm:$0xff]
      %v1065 = vld [vmem:[#allocation2 + $0xa8] sm:$0xff]
      %v1066 = vld [vmem:[#allocation2 + $0xb0] sm:$0xff]
      %v1067 = vld [vmem:[#allocation2 + $0xb8] sm:$0xff]
      %v1068 = vld [vmem:[#allocation2 + $0xc0] sm:$0xff]
      %v1069 = vld [vmem:[#allocation2 + $0xc8] sm:$0xff]
      %v1070 = vld [vmem:[#allocation2 + $0xd0] sm:$0xff]
      %v1071 = vld [vmem:[#allocation2 + $0xd8] sm:$0xff]
      %v1072 = vld [vmem:[#allocation2 + $0xe0] sm:$0xff]
      %v1073 = vld [vmem:[#allocation2 + $0xe8] sm:$0xff]
      %v1074 = vld [vmem:[#allocation2 + $0xf0] sm:$0xff]
      %v1075 = vld [vmem:[#allocation2 + $0xf8] sm:$0xff]
      %v1076 = vld [vmem:[#allocation2 + $0x100] sm:$0xff]
      %v1077 = vld [vmem:[#allocation2 + $0x108] sm:$0xff]
      %v1078 = vld [vmem:[#allocation2 + $0x110] sm:$0xff]
      %v1079 = vld [vmem:[#allocation2 + $0x118] sm:$0xff]
      %v1080 = vld [vmem:[%s4] sm:$0xff]
      %v1081 = vld [vmem:[%s4 + $0x8] sm:$0xff]
      %v1082 = vld [vmem:[%s4 + $0x10] sm:$0xff]
      %v1083 = vld [vmem:[%s4 + $0x18] sm:$0xff]
      %v1084 = vld [vmem:[%s5] sm:$0xff]
      %v1085 = vld [vmem:[%s5 + $0x8] sm:$0xff]
      %1087 = vset.pattern.permute.xlu0 0
      %1088 = vperm.xlu0 %1087, %v1084
      %v1089 = vpop.permute.xlu0 %1088
      %1092 = vset.pattern.permute.xlu0 0
      %1093 = vperm.xlu0 %1092, %v1085
      %v1094 = vpop.permute.xlu0 %1093
      %vm1096 = vcmask 130048
      %v1098 = vsel %vm1096, %v1081, 0
      %v1101 = vsel %vm1096, %v1083, 0
      %1103 = vmatprep.subr.mxu0 %v1075
      %1104 = vmatpush1.msra.mxu0 %v1074
      %1105 = vmatprep.subr.mxu0 %v1073
      %1106 = vmatpush1.msra.mxu0 %v1072
      %1107 = vmatprep.subr.mxu0 %v1071
      %1108 = vmatpush1.msra.mxu0 %v1070
      %1109 = vmatprep.subr.mxu0 %v1069
      %1110 = vmatpush1.msra.mxu0 %v1068
      %1111 = vmatprep.subr.mxu0 %v1067
      %1112 = vmatpush1.msra.mxu0 %v1066
      %1113 = vmatprep.subr.mxu0 %v1065
      %1114 = vmatpush1.msra.mxu0 %v1064
      %1115 = vmatprep.subr.mxu0 %v1063
      %1116 = vmatpush1.msra.mxu0 %v1062
      %1117 = vmatprep.subr.mxu0 %v1061
      %1118 = vmatpush1.msra.mxu0 %v1060
      %1119 = vmatprep.subr.mxu0 %v1059
      %1120 = vmatpush1.msra.mxu0 %v1058
      %1121 = vmatprep.subr.mxu0 %v1057
      %1122 = vmatpush1.msra.mxu0 %v1056
      %1123 = vmatprep.subr.mxu0 %v1055
      %1124 = vmatpush1.msra.mxu0 %v1054
      %1125 = vmatprep.subr.mxu0 %v1053
      %1126 = vmatpush1.msra.mxu0 %v1052
      %1127 = vmatprep.subr.mxu0 %v1051
      %1128 = vmatpush1.msra.mxu0 %v1050
      %1129 = vmatprep.subr.mxu0 %v1049
      %1130 = vmatpush1.msra.mxu0 %v1048
      %1131 = vmatprep.subr.mxu0 %v1047
      %1132 = vmatpush1.msra.mxu0 %v1046
      %1133 = vmatprep.subr.mxu0 %v1045
      %1134 = vmatpush1.msra.mxu0 %v1044
      %1135 = vmatprep.subr.mxu0 0.0
      %1136 = vmatpush2.msra.mxu0 0.0
      %1137 = vmatprep.subr.mxu0 0.0
      %1138 = vmatpush2.msra.mxu0 0.0
      %1139 = vmatprep.subr.mxu0 0.0
      %1140 = vmatpush2.msra.mxu0 0.0
      %1141 = vmatprep.subr.mxu0 0.0
      %1142 = vmatpush2.msra.mxu0 0.0
      %1143 = vmatprep.subr.mxu0 0.0
      %1144 = vmatpush2.msra.mxu0 0.0
      %1145 = vmatprep.subr.mxu0 0.0
      %1146 = vmatpush2.msra.mxu0 0.0
      %1147 = vmatprep.subr.mxu0 0.0
      %1148 = vmatpush2.msra.mxu0 0.0
      %1149 = vmatprep.subr.mxu0 0.0
      %1150 = vmatpush2.msra.mxu0 0.0
      %1151 = vmatprep.subr.mxu0 0.0
      %1152 = vmatpush2.msra.mxu0 0.0
      %1153 = vmatprep.subr.mxu0 0.0
      %1154 = vmatpush2.msra.mxu0 0.0
      %1155 = vmatprep.subr.mxu0 0.0
      %1156 = vmatpush2.msra.mxu0 0.0
      %1157 = vmatprep.subr.mxu0 0.0
      %1158 = vmatpush2.msra.mxu0 0.0
      %1159 = vmatprep.subr.mxu0 0.0
      %1160 = vmatpush2.msra.mxu0 0.0
      %1161 = vmatprep.subr.mxu0 0.0
      %1162 = vmatpush2.msra.mxu0 0.0
      %1163 = vmatprep.subr.mxu0 %v1079
      %1164 = vmatpush2.msra.mxu0 %v1078
      %1165 = vmatprep.subr.mxu0 %v1077
      %1166 = vmatpush2.msra.mxu0 %v1076
      %1167 = vmatprep.mubr.f32.mxu0 %v1098
      %1168 = vmatmul.mubr.f32.gmra.mxu0 %v1080
      %v1169 = vpop.f32.mrf.mxu0
      %v1170 = vadd.f32 %v1089, %v1169
      %v1171 = vpop.f32.mrf.mxu0
      %v1172 = vadd.f32 %v1089, %v1171
      %1173 = vmatprep.mubr.f32.mxu0 %v1101
      %1174 = vmatmul.mubr.f32.gmra.mxu0 %v1082
      %v1175 = vpop.f32.mrf.mxu0
      %v1176 = vadd.f32 %v1094, %v1175
      %v1177 = vpop.f32.mrf.mxu0
      %v1178 = vadd.f32 %v1094, %v1177
      %1179 = vdwg.mxu0
      %v1180 = vld [vmem:[%s9] sm:$0xff]
      %v1181 = vld [vmem:[%s9 + $0x8] sm:$0xff]
      %1183 = vset.pattern.permute.xlu0 0
      %1184 = vperm.xlu0 %1183, %v1180
      %v1185 = vpop.permute.xlu0 %1184
      %1188 = vset.pattern.permute.xlu0 0
      %1189 = vperm.xlu0 %1188, %v1181
      %v1190 = vpop.permute.xlu0 %1189
      %v1192 = vmul.f32 %v1185, %v1170
      %v1193 = vmul.f32 %v1185, %v1172
      %v1194 = vmul.f32 %v1190, %v1176
      %v1195 = vmul.f32 %v1190, %v1178
      %v1196 = vsub.f32 0.0, %v1192
      %v1197 = vsub.f32 0.0, %v1193
      %v1198 = vsub.f32 0.0, %v1194
      %v1199 = vsub.f32 0.0, %v1195
      %v1200 = vmul.f32 %v1196, 1.442695
      %v1201 = vpow.pop %v1200
      %v1202 = vmul.f32 %v1197, 1.442695
      %v1203 = vpow.pop %v1202
      %v1204 = vmul.f32 %v1198, 1.442695
      %v1205 = vpow.pop %v1204
      %v1206 = vmul.f32 %v1199, 1.442695
      %v1207 = vpow.pop %v1206
      %v1208 = vadd.f32 %v1201, 1.0
      %v1209 = vadd.f32 %v1203, 1.0
      %v1210 = vadd.f32 %v1205, 1.0
      %v1211 = vadd.f32 %v1207, 1.0
      %v1212 = vrcp.pop %v1208
      %v1213 = vrcp.pop %v1209
      %v1214 = vrcp.pop %v1210
      %v1215 = vrcp.pop %v1211
      %v1216 = vmul.f32 %v1170, %v1212
      %v1217 = vmul.f32 %v1172, %v1213
      %v1218 = vmul.f32 %v1176, %v1214
      %v1219 = vmul.f32 %v1178, %v1215
      %1220 = vrot.lane.b32.xlu0 %v1216, 17
      %v1221 = vpop.permute.xlu0 %1220
      %1222 = vrot.lane.b32.xlu0 %v1218, 17
      %v1223 = vpop.permute.xlu0 %1222
      %1224 = vrot.lane.b32.xlu0 %v1217, 17
      %v1225 = vpop.permute.xlu0 %1224
      %1226 = vrot.lane.b32.xlu0 %v1219, 17
      %v1227 = vpop.permute.xlu0 %1226
      %v1228 = vsel %vm408, %v1221, %v1225
      %v1229 = vsel %vm408, %v1223, %v1227
      %v1230 = vsel %vm408, %v1225, %v1221
      %v1231 = vsel %vm408, %v1227, %v1223
      %v1232 = vld [vmem:[%s1] ss:$8 sm:$0x3]
      %v1234 = vlaneseq
      %v1235 = vshrl.u32 %v1234, 7
      %v1236 = vsub.s32 0, %v1235
      %v1237 = vrot.slane %v1232, %v1236
      %v1238 = vlaneseq
      %v1239 = vshrl.u32 %v1238, 7
      %v1240 = vsub.s32 1, %v1239
      %v1241 = vrot.slane %v1232, %v1240
      %v1244 = vmul.f32 %v1230, %v1237
      %v1245 = vmul.f32 %v1228, %v1241
      %v1246 = vmul.f32 %v1231, %v1237
      %v1247 = vmul.f32 %v1229, %v1241
      %1248 = vst [vmem:[#allocation2] sm:$0xff] %v1244
      %1249 = vst [vmem:[#allocation2 + $0x8] sm:$0xff] %v1245
      %1250 = vst [vmem:[#allocation2 + $0x10] sm:$0xff] %v1246
      %1251 = vst [vmem:[#allocation2 + $0x18] sm:$0xff] %v1247
      %1252 = vrot.lane.b32.xlu0 %v1216, 16
      %v1253 = vpop.permute.xlu0 %1252
      %1254 = vrot.lane.b32.xlu0 %v1218, 16
      %v1255 = vpop.permute.xlu0 %1254
      %1256 = vrot.lane.b32.xlu0 %v1217, 16
      %v1257 = vpop.permute.xlu0 %1256
      %1258 = vrot.lane.b32.xlu0 %v1219, 16
      %v1259 = vpop.permute.xlu0 %1258
      %v1260 = vsel %vm431, %v1253, %v1257
      %v1261 = vsel %vm431, %v1255, %v1259
      %v1262 = vsel %vm431, %v1257, %v1253
      %v1263 = vsel %vm431, %v1259, %v1255
      %v1264 = vld [vmem:[%s434] ss:$8 sm:$0x3]
      %v1266 = vlaneseq
      %v1267 = vshrl.u32 %v1266, 7
      %v1268 = vsub.s32 0, %v1267
      %v1269 = vrot.slane %v1264, %v1268
      %v1270 = vlaneseq
      %v1271 = vshrl.u32 %v1270, 7
      %v1272 = vsub.s32 1, %v1271
      %v1273 = vrot.slane %v1264, %v1272
      %v1276 = vmul.f32 %v1262, %v1269
      %v1277 = vmul.f32 %v1260, %v1273
      %v1278 = vmul.f32 %v1263, %v1269
      %v1279 = vmul.f32 %v1261, %v1273
      %1280 = vst [vmem:[#allocation2 + $0x20] sm:$0xff] %v1276
      %1281 = vst [vmem:[#allocation2 + $0x28] sm:$0xff] %v1277
      %1282 = vst [vmem:[#allocation2 + $0x30] sm:$0xff] %v1278
      %1283 = vst [vmem:[#allocation2 + $0x38] sm:$0xff] %v1279
      %1284 = vrot.lane.b32.xlu0 %v1216, 15
      %v1285 = vpop.permute.xlu0 %1284
      %1286 = vrot.lane.b32.xlu0 %v1218, 15
      %v1287 = vpop.permute.xlu0 %1286
      %1288 = vrot.lane.b32.xlu0 %v1217, 15
      %v1289 = vpop.permute.xlu0 %1288
      %1290 = vrot.lane.b32.xlu0 %v1219, 15
      %v1291 = vpop.permute.xlu0 %1290
      %v1292 = vsel %vm455, %v1285, %v1289
      %v1293 = vsel %vm455, %v1287, %v1291
      %v1294 = vsel %vm455, %v1289, %v1285
      %v1295 = vsel %vm455, %v1291, %v1287
      %v1296 = vld [vmem:[%s458] ss:$8 sm:$0x3]
      %v1298 = vlaneseq
      %v1299 = vshrl.u32 %v1298, 7
      %v1300 = vsub.s32 0, %v1299
      %v1301 = vrot.slane %v1296, %v1300
      %v1302 = vlaneseq
      %v1303 = vshrl.u32 %v1302, 7
      %v1304 = vsub.s32 1, %v1303
      %v1305 = vrot.slane %v1296, %v1304
      %v1308 = vmul.f32 %v1294, %v1301
      %v1309 = vmul.f32 %v1292, %v1305
      %v1310 = vmul.f32 %v1295, %v1301
      %v1311 = vmul.f32 %v1293, %v1305
      %1312 = vst [vmem:[#allocation2 + $0x40] sm:$0xff] %v1308
      %1313 = vst [vmem:[#allocation2 + $0x48] sm:$0xff] %v1309
      %1314 = vst [vmem:[#allocation2 + $0x50] sm:$0xff] %v1310
      %1315 = vst [vmem:[#allocation2 + $0x58] sm:$0xff] %v1311
      %1316 = vrot.lane.b32.xlu0 %v1216, 1
      %v1317 = vpop.permute.xlu0 %1316
      %1318 = vrot.lane.b32.xlu0 %v1218, 1
      %v1319 = vpop.permute.xlu0 %1318
      %1320 = vrot.lane.b32.xlu0 %v1217, 1
      %v1321 = vpop.permute.xlu0 %1320
      %1322 = vrot.lane.b32.xlu0 %v1219, 1
      %v1323 = vpop.permute.xlu0 %1322
      %v1324 = vsel %vm479, %v1317, %v1321
      %v1325 = vsel %vm479, %v1319, %v1323
      %v1326 = vsel %vm479, %v1321, %v1317
      %v1327 = vsel %vm479, %v1323, %v1319
      %v1328 = vld [vmem:[%s482] ss:$8 sm:$0x3]
      %v1330 = vlaneseq
      %v1331 = vshrl.u32 %v1330, 7
      %v1332 = vsub.s32 0, %v1331
      %v1333 = vrot.slane %v1328, %v1332
      %v1334 = vlaneseq
      %v1335 = vshrl.u32 %v1334, 7
      %v1336 = vsub.s32 1, %v1335
      %v1337 = vrot.slane %v1328, %v1336
      %v1340 = vmul.f32 %v1326, %v1333
      %v1341 = vmul.f32 %v1324, %v1337
      %v1342 = vmul.f32 %v1327, %v1333
      %v1343 = vmul.f32 %v1325, %v1337
      %1344 = vst [vmem:[#allocation2 + $0x60] sm:$0xff] %v1340
      %1345 = vst [vmem:[#allocation2 + $0x68] sm:$0xff] %v1341
      %1346 = vst [vmem:[#allocation2 + $0x70] sm:$0xff] %v1342
      %1347 = vst [vmem:[#allocation2 + $0x78] sm:$0xff] %v1343
      %v1348 = vld [vmem:[%s499] ss:$8 sm:$0x3]
      %v1350 = vlaneseq
      %v1351 = vshrl.u32 %v1350, 7
      %v1352 = vsub.s32 0, %v1351
      %v1353 = vrot.slane %v1348, %v1352
      %v1354 = vlaneseq
      %v1355 = vshrl.u32 %v1354, 7
      %v1356 = vsub.s32 1, %v1355
      %v1357 = vrot.slane %v1348, %v1356
      %v1360 = vmul.f32 %v1216, %v1353
      %v1361 = vmul.f32 %v1217, %v1357
      %v1362 = vmul.f32 %v1218, %v1353
      %v1363 = vmul.f32 %v1219, %v1357
      %1364 = vst [vmem:[#allocation2 + $0x80] sm:$0xff] %v1360
      %1365 = vst [vmem:[#allocation2 + $0x88] sm:$0xff] %v1361
      %1366 = vst [vmem:[#allocation2 + $0x90] sm:$0xff] %v1362
      %1367 = vst [vmem:[#allocation2 + $0x98] sm:$0xff] %v1363
      %1368 = vrot.lane.b32.xlu0 %v1216, 127
      %v1369 = vpop.permute.xlu0 %1368
      %1370 = vrot.lane.b32.xlu0 %v1218, 127
      %v1371 = vpop.permute.xlu0 %1370
      %1372 = vrot.lane.b32.xlu0 %v1217, 127
      %v1373 = vpop.permute.xlu0 %1372
      %1374 = vrot.lane.b32.xlu0 %v1219, 127
      %v1375 = vpop.permute.xlu0 %1374
      %v1376 = vsel %vm520, %v1369, %v1373
      %v1377 = vsel %vm520, %v1371, %v1375
      %v1378 = vsel %vm520, %v1373, %v1369
      %v1379 = vsel %vm520, %v1375, %v1371
      %v1380 = vld [vmem:[%s523] ss:$8 sm:$0x3]
      %v1382 = vlaneseq
      %v1383 = vshrl.u32 %v1382, 7
      %v1384 = vsub.s32 0, %v1383
      %v1385 = vrot.slane %v1380, %v1384
      %v1386 = vlaneseq
      %v1387 = vshrl.u32 %v1386, 7
      %v1388 = vsub.s32 1, %v1387
      %v1389 = vrot.slane %v1380, %v1388
      %v1392 = vmul.f32 %v1376, %v1385
      %v1393 = vmul.f32 %v1378, %v1389
      %v1394 = vmul.f32 %v1377, %v1385
      %v1395 = vmul.f32 %v1379, %v1389
      %1396 = vst [vmem:[#allocation2 + $0xa0] sm:$0xff] %v1392
      %1397 = vst [vmem:[#allocation2 + $0xa8] sm:$0xff] %v1393
      %1398 = vst [vmem:[#allocation2 + $0xb0] sm:$0xff] %v1394
      %1399 = vst [vmem:[#allocation2 + $0xb8] sm:$0xff] %v1395
      %1400 = vrot.lane.b32.xlu0 %v1216, 113
      %v1401 = vpop.permute.xlu0 %1400
      %1402 = vrot.lane.b32.xlu0 %v1218, 113
      %v1403 = vpop.permute.xlu0 %1402
      %1404 = vrot.lane.b32.xlu0 %v1217, 113
      %v1405 = vpop.permute.xlu0 %1404
      %1406 = vrot.lane.b32.xlu0 %v1219, 113
      %v1407 = vpop.permute.xlu0 %1406
      %v1408 = vsel %vm544, %v1401, %v1405
      %v1409 = vsel %vm544, %v1403, %v1407
      %v1410 = vsel %vm544, %v1405, %v1401
      %v1411 = vsel %vm544, %v1407, %v1403
      %v1412 = vld [vmem:[%s547] ss:$8 sm:$0x3]
      %v1414 = vlaneseq
      %v1415 = vshrl.u32 %v1414, 7
      %v1416 = vsub.s32 0, %v1415
      %v1417 = vrot.slane %v1412, %v1416
      %v1418 = vlaneseq
      %v1419 = vshrl.u32 %v1418, 7
      %v1420 = vsub.s32 1, %v1419
      %v1421 = vrot.slane %v1412, %v1420
      %v1424 = vmul.f32 %v1408, %v1417
      %v1425 = vmul.f32 %v1410, %v1421
      %v1426 = vmul.f32 %v1409, %v1417
      %v1427 = vmul.f32 %v1411, %v1421
      %1428 = vst [vmem:[#allocation2 + $0xc0] sm:$0xff] %v1424
      %1429 = vst [vmem:[#allocation2 + $0xc8] sm:$0xff] %v1425
      %1430 = vst [vmem:[#allocation2 + $0xd0] sm:$0xff] %v1426
      %1431 = vst [vmem:[#allocation2 + $0xd8] sm:$0xff] %v1427
      %1432 = vrot.lane.b32.xlu0 %v1216, 112
      %v1433 = vpop.permute.xlu0 %1432
      %1434 = vrot.lane.b32.xlu0 %v1218, 112
      %v1435 = vpop.permute.xlu0 %1434
      %1436 = vrot.lane.b32.xlu0 %v1217, 112
      %v1437 = vpop.permute.xlu0 %1436
      %1438 = vrot.lane.b32.xlu0 %v1219, 112
      %v1439 = vpop.permute.xlu0 %1438
      %v1440 = vsel %vm568, %v1433, %v1437
      %v1441 = vsel %vm568, %v1435, %v1439
      %v1442 = vsel %vm568, %v1437, %v1433
      %v1443 = vsel %vm568, %v1439, %v1435
      %v1444 = vld [vmem:[%s571] ss:$8 sm:$0x3]
      %v1446 = vlaneseq
      %v1447 = vshrl.u32 %v1446, 7
      %v1448 = vsub.s32 0, %v1447
      %v1449 = vrot.slane %v1444, %v1448
      %v1450 = vlaneseq
      %v1451 = vshrl.u32 %v1450, 7
      %v1452 = vsub.s32 1, %v1451
      %v1453 = vrot.slane %v1444, %v1452
      %v1456 = vmul.f32 %v1440, %v1449
      %v1457 = vmul.f32 %v1442, %v1453
      %v1458 = vmul.f32 %v1441, %v1449
      %v1459 = vmul.f32 %v1443, %v1453
      %1460 = vst [vmem:[#allocation2 + $0xe0] sm:$0xff] %v1456
      %1461 = vst [vmem:[#allocation2 + $0xe8] sm:$0xff] %v1457
      %1462 = vst [vmem:[#allocation2 + $0xf0] sm:$0xff] %v1458
      %1463 = vst [vmem:[#allocation2 + $0xf8] sm:$0xff] %v1459
      %1464 = vrot.lane.b32.xlu0 %v1216, 111
      %v1465 = vpop.permute.xlu0 %1464
      %1466 = vrot.lane.b32.xlu0 %v1218, 111
      %v1467 = vpop.permute.xlu0 %1466
      %1468 = vrot.lane.b32.xlu0 %v1217, 111
      %v1469 = vpop.permute.xlu0 %1468
      %1470 = vrot.lane.b32.xlu0 %v1219, 111
      %v1471 = vpop.permute.xlu0 %1470
      %v1472 = vsel %vm592, %v1465, %v1469
      %v1473 = vsel %vm592, %v1467, %v1471
      %v1474 = vsel %vm592, %v1469, %v1465
      %v1475 = vsel %vm592, %v1471, %v1467
      %v1476 = vld [vmem:[%s595] ss:$8 sm:$0x3]
      %v1478 = vlaneseq
      %v1479 = vshrl.u32 %v1478, 7
      %v1480 = vsub.s32 0, %v1479
      %v1481 = vrot.slane %v1476, %v1480
      %v1482 = vlaneseq
      %v1483 = vshrl.u32 %v1482, 7
      %v1484 = vsub.s32 1, %v1483
      %v1485 = vrot.slane %v1476, %v1484
      %v1488 = vmul.f32 %v1472, %v1481
      %v1489 = vmul.f32 %v1474, %v1485
      %v1490 = vmul.f32 %v1473, %v1481
      %v1491 = vmul.f32 %v1475, %v1485
      %1492 = vst [vmem:[#allocation2 + $0x100] sm:$0xff] %v1488
      %1493 = vst [vmem:[#allocation2 + $0x108] sm:$0xff] %v1489
      %1494 = vst [vmem:[#allocation2 + $0x110] sm:$0xff] %v1490
      %1495 = vst [vmem:[#allocation2 + $0x118] sm:$0xff] %v1491
      %v1496 = vld [vmem:[#allocation2] sm:$0xff]
      %v1497 = vld [vmem:[#allocation2 + $0x8] sm:$0xff]
      %v1498 = vld [vmem:[#allocation2 + $0x10] sm:$0xff]
      %v1499 = vld [vmem:[#allocation2 + $0x18] sm:$0xff]
      %v1500 = vld [vmem:[#allocation2 + $0x20] sm:$0xff]
      %v1501 = vld [vmem:[#allocation2 + $0x28] sm:$0xff]
      %v1502 = vld [vmem:[#allocation2 + $0x30] sm:$0xff]
      %v1503 = vld [vmem:[#allocation2 + $0x38] sm:$0xff]
      %v1504 = vld [vmem:[#allocation2 + $0x40] sm:$0xff]
      %v1505 = vld [vmem:[#allocation2 + $0x48] sm:$0xff]
      %v1506 = vld [vmem:[#allocation2 + $0x50] sm:$0xff]
      %v1507 = vld [vmem:[#allocation2 + $0x58] sm:$0xff]
      %v1508 = vld [vmem:[#allocation2 + $0x60] sm:$0xff]
      %v1509 = vld [vmem:[#allocation2 + $0x68] sm:$0xff]
      %v1510 = vld [vmem:[#allocation2 + $0x70] sm:$0xff]
      %v1511 = vld [vmem:[#allocation2 + $0x78] sm:$0xff]
      %v1512 = vld [vmem:[#allocation2 + $0x80] sm:$0xff]
      %v1513 = vld [vmem:[#allocation2 + $0x88] sm:$0xff]
      %v1514 = vld [vmem:[#allocation2 + $0x90] sm:$0xff]
      %v1515 = vld [vmem:[#allocation2 + $0x98] sm:$0xff]
      %v1516 = vld [vmem:[#allocation2 + $0xa0] sm:$0xff]
      %v1517 = vld [vmem:[#allocation2 + $0xa8] sm:$0xff]
      %v1518 = vld [vmem:[#allocation2 + $0xb0] sm:$0xff]
      %v1519 = vld [vmem:[#allocation2 + $0xb8] sm:$0xff]
      %v1520 = vld [vmem:[#allocation2 + $0xc0] sm:$0xff]
      %v1521 = vld [vmem:[#allocation2 + $0xc8] sm:$0xff]
      %v1522 = vld [vmem:[#allocation2 + $0xd0] sm:$0xff]
      %v1523 = vld [vmem:[#allocation2 + $0xd8] sm:$0xff]
      %v1524 = vld [vmem:[#allocation2 + $0xe0] sm:$0xff]
      %v1525 = vld [vmem:[#allocation2 + $0xe8] sm:$0xff]
      %v1526 = vld [vmem:[#allocation2 + $0xf0] sm:$0xff]
      %v1527 = vld [vmem:[#allocation2 + $0xf8] sm:$0xff]
      %v1528 = vld [vmem:[#allocation2 + $0x100] sm:$0xff]
      %v1529 = vld [vmem:[#allocation2 + $0x108] sm:$0xff]
      %v1530 = vld [vmem:[#allocation2 + $0x110] sm:$0xff]
      %v1531 = vld [vmem:[#allocation2 + $0x118] sm:$0xff]
      %v1532 = vld [vmem:[%s6] sm:$0xff]
      %v1533 = vld [vmem:[%s6 + $0x8] sm:$0xff]
      %v1534 = vld [vmem:[%s6 + $0x10] sm:$0xff]
      %v1535 = vld [vmem:[%s6 + $0x18] sm:$0xff]
      %v1536 = vld [vmem:[%s7] sm:$0xff]
      %v1537 = vld [vmem:[%s7 + $0x8] sm:$0xff]
      %1539 = vset.pattern.permute.xlu0 0
      %1540 = vperm.xlu0 %1539, %v1536
      %v1541 = vpop.permute.xlu0 %1540
      %1544 = vset.pattern.permute.xlu0 0
      %1545 = vperm.xlu0 %1544, %v1537
      %v1546 = vpop.permute.xlu0 %1545
      %v1549 = vsel %vm1096, %v1533, 0
      %v1552 = vsel %vm1096, %v1535, 0
      %1554 = vmatprep.subr.mxu0 %v1527
      %1555 = vmatpush1.msra.mxu0 %v1526
      %1556 = vmatprep.subr.mxu0 %v1525
      %1557 = vmatpush1.msra.mxu0 %v1524
      %1558 = vmatprep.subr.mxu0 %v1523
      %1559 = vmatpush1.msra.mxu0 %v1522
      %1560 = vmatprep.subr.mxu0 %v1521
      %1561 = vmatpush1.msra.mxu0 %v1520
      %1562 = vmatprep.subr.mxu0 %v1519
      %1563 = vmatpush1.msra.mxu0 %v1518
      %1564 = vmatprep.subr.mxu0 %v1517
      %1565 = vmatpush1.msra.mxu0 %v1516
      %1566 = vmatprep.subr.mxu0 %v1515
      %1567 = vmatpush1.msra.mxu0 %v1514
      %1568 = vmatprep.subr.mxu0 %v1513
      %1569 = vmatpush1.msra.mxu0 %v1512
      %1570 = vmatprep.subr.mxu0 %v1511
      %1571 = vmatpush1.msra.mxu0 %v1510
      %1572 = vmatprep.subr.mxu0 %v1509
      %1573 = vmatpush1.msra.mxu0 %v1508
      %1574 = vmatprep.subr.mxu0 %v1507
      %1575 = vmatpush1.msra.mxu0 %v1506
      %1576 = vmatprep.subr.mxu0 %v1505
      %1577 = vmatpush1.msra.mxu0 %v1504
      %1578 = vmatprep.subr.mxu0 %v1503
      %1579 = vmatpush1.msra.mxu0 %v1502
      %1580 = vmatprep.subr.mxu0 %v1501
      %1581 = vmatpush1.msra.mxu0 %v1500
      %1582 = vmatprep.subr.mxu0 %v1499
      %1583 = vmatpush1.msra.mxu0 %v1498
      %1584 = vmatprep.subr.mxu0 %v1497
      %1585 = vmatpush1.msra.mxu0 %v1496
      %1586 = vmatprep.subr.mxu0 0.0
      %1587 = vmatpush2.msra.mxu0 0.0
      %1588 = vmatprep.subr.mxu0 0.0
      %1589 = vmatpush2.msra.mxu0 0.0
      %1590 = vmatprep.subr.mxu0 0.0
      %1591 = vmatpush2.msra.mxu0 0.0
      %1592 = vmatprep.subr.mxu0 0.0
      %1593 = vmatpush2.msra.mxu0 0.0
      %1594 = vmatprep.subr.mxu0 0.0
      %1595 = vmatpush2.msra.mxu0 0.0
      %1596 = vmatprep.subr.mxu0 0.0
      %1597 = vmatpush2.msra.mxu0 0.0
      %1598 = vmatprep.subr.mxu0 0.0
      %1599 = vmatpush2.msra.mxu0 0.0
      %1600 = vmatprep.subr.mxu0 0.0
      %1601 = vmatpush2.msra.mxu0 0.0
      %1602 = vmatprep.subr.mxu0 0.0
      %1603 = vmatpush2.msra.mxu0 0.0
      %1604 = vmatprep.subr.mxu0 0.0
      %1605 = vmatpush2.msra.mxu0 0.0
      %1606 = vmatprep.subr.mxu0 0.0
      %1607 = vmatpush2.msra.mxu0 0.0
      %1608 = vmatprep.subr.mxu0 0.0
      %1609 = vmatpush2.msra.mxu0 0.0
      %1610 = vmatprep.subr.mxu0 0.0
      %1611 = vmatpush2.msra.mxu0 0.0
      %1612 = vmatprep.subr.mxu0 0.0
      %1613 = vmatpush2.msra.mxu0 0.0
      %1614 = vmatprep.subr.mxu0 %v1531
      %1615 = vmatpush2.msra.mxu0 %v1530
      %1616 = vmatprep.subr.mxu0 %v1529
      %1617 = vmatpush2.msra.mxu0 %v1528
      %1618 = vmatprep.mubr.f32.mxu0 %v1549
      %1619 = vmatmul.mubr.f32.gmra.mxu0 %v1532
      %v1620 = vpop.f32.mrf.mxu0
      %v1621 = vadd.f32 %v1541, %v1620
      %v1622 = vpop.f32.mrf.mxu0
      %v1623 = vadd.f32 %v1541, %v1622
      %1624 = vmatprep.mubr.f32.mxu0 %v1552
      %1625 = vmatmul.mubr.f32.gmra.mxu0 %v1534
      %v1626 = vpop.f32.mrf.mxu0
      %v1627 = vadd.f32 %v1546, %v1626
      %v1628 = vpop.f32.mrf.mxu0
      %v1629 = vadd.f32 %v1546, %v1628
      %1630 = vdwg.mxu0
      %v1631 = vadd.f32 %v1621, %v1627
      %v1632 = vadd.f32 %v1623, %v1629
      %v1633 = vsub.f32 0.0, %v1631
      %v1634 = vsub.f32 0.0, %v1632
      %v1635 = vmul.f32 %v1633, 1.442695
      %v1636 = vpow.pop %v1635
      %v1637 = vmul.f32 %v1634, 1.442695
      %v1638 = vpow.pop %v1637
      %v1639 = vadd.f32 %v1636, 1.0
      %v1640 = vadd.f32 %v1638, 1.0
      %v1641 = vrcp.pop %v1639
      %v1642 = vrcp.pop %v1640
      %v1643 = vmul.f32 %v1631, %v1641
      %v1644 = vmul.f32 %v1632, %v1642
      %v1645 = vadd.f32 %v1643, %v400
      %v1646 = vadd.f32 %v1644, %v401
      %1647 = vst [vmem:[%s394] sm:$0xff] %v1645
      %1648 = vst [vmem:[%s394 + $0x8] sm:$0xff] %v1646
      %1649 = vst [vmem:[%s399] sm:$0xff] %v718
      %1650 = vst [vmem:[%s399 + $0x8] sm:$0xff] %v720
      %p1651 = scmp.lt.s32.totalorder %s23, 1
      %s1652 = scalar_select %p1651, %s23, 1
      %s1653 = smul.addr %s1652, 2
      %s1654 = smul.addr %s1653, 8
      %s1655 = scalar_lea.vmem %s10, %s1654
      %p1656 = scmp.lt.s32.totalorder %s23, 1
      %s1657 = scalar_select %p1656, %s23, 1
      %s1658 = smul.addr %s1657, 2
      %s1659 = smul.addr %s1658, 8
      %s1660 = scalar_lea.vmem %s11, %s1659
      // Predicated region
      $region61: #{spab2_forward_pallas.1} parent=59 // pred_check
        %p1661 = pneg %p256
      $region62: #{spab2_forward_pallas.1} parent=59 // pred_check_branch
        %1663 = sbr.rel (%p1661) target = $region64
      $region63: #{spab2_forward_pallas.1} parent=59 // pred_region
        _
      $region64: #{spab2_forward_pallas.1} parent=59 // pred_fallthru
        _
      // Predicated region
      $region65: #{spab2_forward_pallas.1} parent=59 // pred_check
        %p1664 = pneg %p282
      $region66: #{spab2_forward_pallas.1} parent=59 // pred_check_branch
        %1666 = sbr.rel (%p1664) target = $region68
      $region67: #{spab2_forward_pallas.1} parent=59 // pred_region
        _
      $region68: #{spab2_forward_pallas.1} parent=59 // pred_fallthru
        _
    $region60: #{spab2_forward_pallas.1} parent=5 // pred_fallthru
      _
    %p1667 = scmp.le.s32.totalorder 2, %s18
    // Predicated region
    $region69: #{spab2_forward_pallas.1} parent=5 // pred_check
      %p1668 = pneg %p1667
    $region70: #{spab2_forward_pallas.1} parent=5 // pred_check_branch
      %1670 = sbr.rel (%p1668) target = $region72
    $region71: #{spab2_forward_pallas.1} parent=5 // pred_region
      %s1671 = ssub.s32 %s18, 2
      // Predicated region
      $region73: #{spab2_forward_pallas.1} parent=71 // pred_check
        %p1672 = pneg %p262
      $region74: #{spab2_forward_pallas.1} parent=71 // pred_check_branch
        %1674 = sbr.rel (%p1672) target = $region76
      $region75: #{spab2_forward_pallas.1} parent=71 // pred_region
        %p1675 = scmp.lt.s32.totalorder %s24, 1
        %s1676 = scalar_select %p1675, %s24, 1
        %s1677 = smul.addr %s1676, 2
        %s1678 = smul.addr %s1677, 8
        %s1679 = scalar_lea.vmem %s10, %s1678
      $region76: #{spab2_forward_pallas.1} parent=71 // pred_fallthru
        _
      // Predicated region
      $region77: #{spab2_forward_pallas.1} parent=71 // pred_check
        %p1680 = pneg %p288
      $region78: #{spab2_forward_pallas.1} parent=71 // pred_check_branch
        %1682 = sbr.rel (%p1680) target = $region80
      $region79: #{spab2_forward_pallas.1} parent=71 // pred_region
        %p1683 = scmp.lt.s32.totalorder %s24, 1
        %s1684 = scalar_select %p1683, %s24, 1
        %s1685 = smul.addr %s1684, 2
        %s1686 = smul.addr %s1685, 8
        %s1687 = scalar_lea.vmem %s11, %s1686
      $region80: #{spab2_forward_pallas.1} parent=71 // pred_fallthru
        _
    $region72: #{spab2_forward_pallas.1} parent=5 // pred_fallthru
      _
  $region6: #{spab2_forward_pallas.1} parent=0 // loop_footer
    %s22 = sadd.s32 1, %s18
  $region7: #{spab2_forward_pallas.1} parent=0 // loop_footer_branch
    %17 = sbr.rel target = $region3
  $region8: #{spab2_forward_pallas.1} parent=0 // loop_exit
    _

</llo_original>
